<compile_context>
chip_gen: v5e
topology: v5e:2x2
jax: 0.10.0
libtpu: 0.0.40
codegen_flags: <defaults>
</compile_context>

<pallas_src>
import functools

import jax
import jax.numpy as jnp
from jax.experimental import pallas as pl
from jax.experimental.pallas import tpu as pltpu

hidden_units = [256, 128, 64]  # from the reference model


def _round_up(x, m):
    return (x + m - 1) // m * m


def _product_kernel(z_ref, s_ref, wz_ref, wp_ref, b_ref, o_ref, *,
                    mode, field_num, embed_dim):
    """One batch tile.
    z_ref:[Bt,F*D]  s_ref:[Bt,F,D]  wz_ref:[F*D,Hp]  wp_ref:[K,K,Hp]
    b_ref:[1,Hp] (f32)  o_ref:[Bt,Hp] (f32)."""
    # --- l_z: single big MXU matmul over the flattened (field, embed) axis ---
    acc = jnp.dot(z_ref[...], wz_ref[...], preferred_element_type=jnp.float32)

    s = s_ref[...].astype(jnp.float32)                            # [Bt, F, D]

    if mode == "in":
        # l_p[b,h] = sum_{f,g,d} s[b,f,d] * s[b,g,d] * w_p[f,g,h]
        for f in range(field_num):                                # static unroll
            # p_f[b,g] = <s[b,f,:], s[b,g,:]>  (VPU mul + lane reduce, on-chip)
            p_f = jnp.sum(s[:, f:f + 1, :] * s, axis=-1)          # [Bt, F]
            acc += jnp.dot(p_f.astype(wp_ref.dtype), wp_ref[f],
                           preferred_element_type=jnp.float32)    # [Bt, Hp]
    else:
        # fs[b,d] = sum_f s[b,f,d]  (cheap sublane reduce)
        fs = jnp.sum(s, axis=1)                                   # [Bt, D]
        for i in range(embed_dim):                                # static unroll
            q_i = fs[:, i:i + 1] * fs                             # [Bt, D]
            acc += jnp.dot(q_i.astype(wp_ref.dtype), wp_ref[i],
                           preferred_element_type=jnp.float32)

    o_ref[...] = (acc + b_ref[...]).astype(o_ref.dtype)           # fused bias add


def product_layer_pallas(z, sparse_embeds, w_z, w_p, l_b, *, mode,
                         block_b=None, compute_dtype=jnp.bfloat16):
    """Pallas TPU forward for ProductLayer. Returns [B, H] float32."""
    assert mode in ("in", "out")
    B, F, D = z.shape
    assert sparse_embeds.shape == (B, F, D)
    H = w_z.shape[-1]
    K2 = F if mode == "in" else D
    assert w_z.shape == (F, D, H)
    assert w_p.shape == (K2, K2, H)

    Hp = _round_up(H, 128)                      # lane-dense output stores
    if block_b is None:
        block_b = min(256, _round_up(B, 8))     # tiny VMEM footprint; 256 is safe
    block_b = _round_up(block_b, 8)
    Bp = _round_up(B, block_b)

    # Host-side (traced once) flatten / pad / cast -- no per-step weight work.
    z2 = z.reshape(B, F * D).astype(compute_dtype)
    s3 = sparse_embeds.astype(compute_dtype)
    if Bp != B:
        z2 = jnp.pad(z2, ((0, Bp - B), (0, 0)))
        s3 = jnp.pad(s3, ((0, Bp - B), (0, 0), (0, 0)))
    wz2 = jnp.pad(w_z.reshape(F * D, H), ((0, 0), (0, Hp - H))).astype(compute_dtype)
    wp3 = jnp.pad(w_p, ((0, 0), (0, 0), (0, Hp - H))).astype(compute_dtype)
    b2 = jnp.pad(l_b.reshape(1, H), ((0, 0), (0, Hp - H))).astype(jnp.float32)

    grid = (Bp // block_b,)
    kernel = functools.partial(_product_kernel, mode=mode,
                               field_num=F, embed_dim=D)

    # Advisory cost estimate so XLA schedules neighbors around the custom call.
    itm = z2.dtype.itemsize
    if mode == "in":
        quad_flops = 2 * Bp * F * F * (D + Hp)
    else:
        quad_flops = Bp * F * D + 2 * Bp * D * D * (1 + Hp)
    flops = 2 * Bp * F * D * Hp + quad_flops
    bytes_accessed = ((z2.size + s3.size + wz2.size + wp3.size) * itm
                      + b2.size * 4 + Bp * Hp * 4)

    out = pl.pallas_call(
        kernel,
        out_shape=jax.ShapeDtypeStruct((Bp, Hp), jnp.float32),
        grid=grid,
        in_specs=[
            pl.BlockSpec((block_b, F * D), lambda i: (i, 0)),    # z tile (flattened)
            pl.BlockSpec((block_b, F, D), lambda i: (i, 0, 0)),  # sparse_embeds tile
            pl.BlockSpec((F * D, Hp), lambda i: (0, 0)),         # w_z  (resident)
            pl.BlockSpec((K2, K2, Hp), lambda i: (0, 0, 0)),     # w_p  (resident)
            pl.BlockSpec((1, Hp), lambda i: (0, 0)),             # bias (resident)
        ],
        out_specs=pl.BlockSpec((block_b, Hp), lambda i: (i, 0)),
        compiler_params=pltpu.CompilerParams(
            dimension_semantics=("parallel",),   # batch tiles are independent
        ),
        cost_estimate=pl.CostEstimate(flops=int(flops), transcendentals=0,
                                      bytes_accessed=int(bytes_accessed)),
    )(z2, s3, wz2, wp3, b2)

    return out[:B, :H]


def product_layer_ref(z, sparse_embeds, w_z, w_p, l_b, mode):
    """Pure-JAX f32 reference (mirrors the PyTorch forward)."""
    B, F, D = z.shape
    H = w_z.shape[-1]
    l_z = z.reshape(B, F * D) @ w_z.reshape(F * D, H)
    if mode == "in":
        p = jnp.einsum("bfd,bgd->bfg", sparse_embeds, sparse_embeds)
        l_p = p.reshape(B, F * F) @ w_p.reshape(F * F, H)
    else:
        fs = jnp.sum(sparse_embeds, axis=1)
        p = fs[:, :, None] * fs[:, None, :]
        l_p = p.reshape(B, D * D) @ w_p.reshape(D * D, H)
    return l_z + l_p + l_b


if __name__ == "__main__":
    key = jax.random.PRNGKey(0)
    # (mode, batch, field_num, embed_dim, hidden); exercises batch padding and
    # H-padding-to-128 paths.
    configs = [("in", 10, 8, 16, hidden_units[0]), ("out", 12, 8, 16, 200)]
    for mode, B, F, D, H in configs:
        key, kz, ks, kwz, kwp, kb = jax.random.split(key, 6)
        z = jax.random.uniform(kz, (B, F, D), jnp.float32)
        s = jax.random.uniform(ks, (B, F, D), jnp.float32)
        w_z = jax.random.uniform(kwz, (F, D, H), jnp.float32)
        K2 = F if mode == "in" else D
        w_p = jax.random.uniform(kwp, (K2, K2, H), jnp.float32)
        l_b = jax.random.uniform(kb, (H,), jnp.float32)

        ref = product_layer_ref(z, s, w_z, w_p, l_b, mode)
        for cdt, tol in ((jnp.float32, 1e-2), (jnp.bfloat16, 4e-2)):
            out = product_layer_pallas(z, s, w_z, w_p, l_b, mode=mode,
                                       compute_dtype=cdt)
            out = jax.block_until_ready(out)
            assert out.shape == (B, H), (out.shape, (B, H))
            rel = float(jnp.max(jnp.abs(out - ref)) / (jnp.max(jnp.abs(ref)) + 1e-6))
            assert rel < tol, f"mode={mode} compute_dtype={cdt} rel_err={rel}"
    print("KERNEL_OK")
</pallas_src>

<mosaic_0001>
module attributes {stable_mosaic.version = 11 : i64} {
  func.func @_product_kernel(%arg0: i32, %arg1: memref<16x128xf32, #tpu.memory_space<vmem>>, %arg2: memref<16x8x16xf32, #tpu.memory_space<vmem>>, %arg3: memref<128x256xf32, #tpu.memory_space<vmem>>, %arg4: memref<8x8x256xf32, #tpu.memory_space<vmem>>, %arg5: memref<1x256xf32, #tpu.memory_space<vmem>>, %arg6: memref<16x256xf32, #tpu.memory_space<vmem>>) attributes {dimension_semantics = [#tpu.dimension_semantics<parallel>], iteration_bounds = array<i64: 1>, scalar_prefetch = 0 : i64, scratch_operands = 0 : i64, tpu.core_type = #tpu.core_type<tc>, window_params = [{transform_indices = @transform_0, window_bounds = array<i64: 16, 128>}, {transform_indices = @transform_1, window_bounds = array<i64: 16, 8, 16>}, {pipeline_mode = #tpu.pipeline_mode<synchronous>, transform_indices = @transform_2, window_bounds = array<i64: 128, 256>}, {pipeline_mode = #tpu.pipeline_mode<synchronous>, transform_indices = @transform_3, window_bounds = array<i64: 8, 8, 256>}, {pipeline_mode = #tpu.pipeline_mode<synchronous>, transform_indices = @transform_4, window_bounds = array<i64: 1, 256>}, {transform_indices = @transform_5, window_bounds = array<i64: 16, 256>}]} {
    %c0 = arith.constant 0 : index
    %c0_0 = arith.constant 0 : index
    %0 = vector.load %arg1[%c0, %c0_0] : memref<16x128xf32, #tpu.memory_space<vmem>>, vector<16x128xf32>
    %c0_1 = arith.constant 0 : index
    %c0_2 = arith.constant 0 : index
    %1 = vector.load %arg3[%c0_1, %c0_2] : memref<128x256xf32, #tpu.memory_space<vmem>>, vector<128x256xf32>
    %cst = arith.constant dense<0.000000e+00> : vector<16x256xf32>
    %2 = tpu.matmul %0, %1, %cst {dimension_numbers = #tpu.dot_dimension_numbers<[1], [0], [0], [1], [0, 0, 1, 1], [], []>} : vector<16x128xf32>, vector<128x256xf32>, vector<16x256xf32> -> vector<16x256xf32>
    %c0_3 = arith.constant 0 : index
    %c0_4 = arith.constant 0 : index
    %c0_5 = arith.constant 0 : index
    %3 = vector.load %arg2[%c0_3, %c0_4, %c0_5] : memref<16x8x16xf32, #tpu.memory_space<vmem>>, vector<16x8x16xf32>
    %4 = vector.extract_strided_slice %3 {offsets = [0, 0, 0], sizes = [16, 1, 16], strides = [1, 1, 1]} : vector<16x8x16xf32> to vector<16x1x16xf32>
    %5 = vector.broadcast %4 : vector<16x1x16xf32> to vector<16x8x16xf32>
    %6 = arith.mulf %5, %3 : vector<16x8x16xf32>
    %cst_6 = arith.constant dense<0.000000e+00> : vector<16x8xf32>
    %7 = vector.multi_reduction <add>, %6, %cst_6 [2] : vector<16x8x16xf32> to vector<16x8xf32>
    %c0_7 = arith.constant 0 : index
    %c0_8 = arith.constant 0 : index
    %c0_9 = arith.constant 0 : index
    %8 = vector.load %arg4[%c0_7, %c0_8, %c0_9] : memref<8x8x256xf32, #tpu.memory_space<vmem>>, vector<1x8x256xf32>
    %9 = vector.shape_cast %8 : vector<1x8x256xf32> to vector<8x256xf32>
    %cst_10 = arith.constant dense<0.000000e+00> : vector<16x256xf32>
    %10 = tpu.matmul %7, %9, %cst_10 {dimension_numbers = #tpu.dot_dimension_numbers<[1], [0], [0], [1], [0, 0, 1, 1], [], []>} : vector<16x8xf32>, vector<8x256xf32>, vector<16x256xf32> -> vector<16x256xf32>
    %11 = arith.addf %2, %10 : vector<16x256xf32>
    %12 = vector.extract_strided_slice %3 {offsets = [0, 1, 0], sizes = [16, 1, 16], strides = [1, 1, 1]} : vector<16x8x16xf32> to vector<16x1x16xf32>
    %13 = vector.broadcast %12 : vector<16x1x16xf32> to vector<16x8x16xf32>
    %14 = arith.mulf %13, %3 : vector<16x8x16xf32>
    %cst_11 = arith.constant dense<0.000000e+00> : vector<16x8xf32>
    %15 = vector.multi_reduction <add>, %14, %cst_11 [2] : vector<16x8x16xf32> to vector<16x8xf32>
    %c1 = arith.constant 1 : index
    %c0_12 = arith.constant 0 : index
    %c0_13 = arith.constant 0 : index
    %16 = vector.load %arg4[%c1, %c0_12, %c0_13] : memref<8x8x256xf32, #tpu.memory_space<vmem>>, vector<1x8x256xf32>
    %17 = vector.shape_cast %16 : vector<1x8x256xf32> to vector<8x256xf32>
    %cst_14 = arith.constant dense<0.000000e+00> : vector<16x256xf32>
    %18 = tpu.matmul %15, %17, %cst_14 {dimension_numbers = #tpu.dot_dimension_numbers<[1], [0], [0], [1], [0, 0, 1, 1], [], []>} : vector<16x8xf32>, vector<8x256xf32>, vector<16x256xf32> -> vector<16x256xf32>
    %19 = arith.addf %11, %18 : vector<16x256xf32>
    %20 = vector.extract_strided_slice %3 {offsets = [0, 2, 0], sizes = [16, 1, 16], strides = [1, 1, 1]} : vector<16x8x16xf32> to vector<16x1x16xf32>
    %21 = vector.broadcast %20 : vector<16x1x16xf32> to vector<16x8x16xf32>
    %22 = arith.mulf %21, %3 : vector<16x8x16xf32>
    %cst_15 = arith.constant dense<0.000000e+00> : vector<16x8xf32>
    %23 = vector.multi_reduction <add>, %22, %cst_15 [2] : vector<16x8x16xf32> to vector<16x8xf32>
    %c2 = arith.constant 2 : index
    %c0_16 = arith.constant 0 : index
    %c0_17 = arith.constant 0 : index
    %24 = vector.load %arg4[%c2, %c0_16, %c0_17] : memref<8x8x256xf32, #tpu.memory_space<vmem>>, vector<1x8x256xf32>
    %25 = vector.shape_cast %24 : vector<1x8x256xf32> to vector<8x256xf32>
    %cst_18 = arith.constant dense<0.000000e+00> : vector<16x256xf32>
    %26 = tpu.matmul %23, %25, %cst_18 {dimension_numbers = #tpu.dot_dimension_numbers<[1], [0], [0], [1], [0, 0, 1, 1], [], []>} : vector<16x8xf32>, vector<8x256xf32>, vector<16x256xf32> -> vector<16x256xf32>
    %27 = arith.addf %19, %26 : vector<16x256xf32>
    %28 = vector.extract_strided_slice %3 {offsets = [0, 3, 0], sizes = [16, 1, 16], strides = [1, 1, 1]} : vector<16x8x16xf32> to vector<16x1x16xf32>
    %29 = vector.broadcast %28 : vector<16x1x16xf32> to vector<16x8x16xf32>
    %30 = arith.mulf %29, %3 : vector<16x8x16xf32>
    %cst_19 = arith.constant dense<0.000000e+00> : vector<16x8xf32>
    %31 = vector.multi_reduction <add>, %30, %cst_19 [2] : vector<16x8x16xf32> to vector<16x8xf32>
    %c3 = arith.constant 3 : index
    %c0_20 = arith.constant 0 : index
    %c0_21 = arith.constant 0 : index
    %32 = vector.load %arg4[%c3, %c0_20, %c0_21] : memref<8x8x256xf32, #tpu.memory_space<vmem>>, vector<1x8x256xf32>
    %33 = vector.shape_cast %32 : vector<1x8x256xf32> to vector<8x256xf32>
    %cst_22 = arith.constant dense<0.000000e+00> : vector<16x256xf32>
    %34 = tpu.matmul %31, %33, %cst_22 {dimension_numbers = #tpu.dot_dimension_numbers<[1], [0], [0], [1], [0, 0, 1, 1], [], []>} : vector<16x8xf32>, vector<8x256xf32>, vector<16x256xf32> -> vector<16x256xf32>
    %35 = arith.addf %27, %34 : vector<16x256xf32>
    %36 = vector.extract_strided_slice %3 {offsets = [0, 4, 0], sizes = [16, 1, 16], strides = [1, 1, 1]} : vector<16x8x16xf32> to vector<16x1x16xf32>
    %37 = vector.broadcast %36 : vector<16x1x16xf32> to vector<16x8x16xf32>
    %38 = arith.mulf %37, %3 : vector<16x8x16xf32>
    %cst_23 = arith.constant dense<0.000000e+00> : vector<16x8xf32>
    %39 = vector.multi_reduction <add>, %38, %cst_23 [2] : vector<16x8x16xf32> to vector<16x8xf32>
    %c4 = arith.constant 4 : index
    %c0_24 = arith.constant 0 : index
    %c0_25 = arith.constant 0 : index
    %40 = vector.load %arg4[%c4, %c0_24, %c0_25] : memref<8x8x256xf32, #tpu.memory_space<vmem>>, vector<1x8x256xf32>
    %41 = vector.shape_cast %40 : vector<1x8x256xf32> to vector<8x256xf32>
    %cst_26 = arith.constant dense<0.000000e+00> : vector<16x256xf32>
    %42 = tpu.matmul %39, %41, %cst_26 {dimension_numbers = #tpu.dot_dimension_numbers<[1], [0], [0], [1], [0, 0, 1, 1], [], []>} : vector<16x8xf32>, vector<8x256xf32>, vector<16x256xf32> -> vector<16x256xf32>
    %43 = arith.addf %35, %42 : vector<16x256xf32>
    %44 = vector.extract_strided_slice %3 {offsets = [0, 5, 0], sizes = [16, 1, 16], strides = [1, 1, 1]} : vector<16x8x16xf32> to vector<16x1x16xf32>
    %45 = vector.broadcast %44 : vector<16x1x16xf32> to vector<16x8x16xf32>
    %46 = arith.mulf %45, %3 : vector<16x8x16xf32>
    %cst_27 = arith.constant dense<0.000000e+00> : vector<16x8xf32>
    %47 = vector.multi_reduction <add>, %46, %cst_27 [2] : vector<16x8x16xf32> to vector<16x8xf32>
    %c5 = arith.constant 5 : index
    %c0_28 = arith.constant 0 : index
    %c0_29 = arith.constant 0 : index
    %48 = vector.load %arg4[%c5, %c0_28, %c0_29] : memref<8x8x256xf32, #tpu.memory_space<vmem>>, vector<1x8x256xf32>
    %49 = vector.shape_cast %48 : vector<1x8x256xf32> to vector<8x256xf32>
    %cst_30 = arith.constant dense<0.000000e+00> : vector<16x256xf32>
    %50 = tpu.matmul %47, %49, %cst_30 {dimension_numbers = #tpu.dot_dimension_numbers<[1], [0], [0], [1], [0, 0, 1, 1], [], []>} : vector<16x8xf32>, vector<8x256xf32>, vector<16x256xf32> -> vector<16x256xf32>
    %51 = arith.addf %43, %50 : vector<16x256xf32>
    %52 = vector.extract_strided_slice %3 {offsets = [0, 6, 0], sizes = [16, 1, 16], strides = [1, 1, 1]} : vector<16x8x16xf32> to vector<16x1x16xf32>
    %53 = vector.broadcast %52 : vector<16x1x16xf32> to vector<16x8x16xf32>
    %54 = arith.mulf %53, %3 : vector<16x8x16xf32>
    %cst_31 = arith.constant dense<0.000000e+00> : vector<16x8xf32>
    %55 = vector.multi_reduction <add>, %54, %cst_31 [2] : vector<16x8x16xf32> to vector<16x8xf32>
    %c6 = arith.constant 6 : index
    %c0_32 = arith.constant 0 : index
    %c0_33 = arith.constant 0 : index
    %56 = vector.load %arg4[%c6, %c0_32, %c0_33] : memref<8x8x256xf32, #tpu.memory_space<vmem>>, vector<1x8x256xf32>
    %57 = vector.shape_cast %56 : vector<1x8x256xf32> to vector<8x256xf32>
    %cst_34 = arith.constant dense<0.000000e+00> : vector<16x256xf32>
    %58 = tpu.matmul %55, %57, %cst_34 {dimension_numbers = #tpu.dot_dimension_numbers<[1], [0], [0], [1], [0, 0, 1, 1], [], []>} : vector<16x8xf32>, vector<8x256xf32>, vector<16x256xf32> -> vector<16x256xf32>
    %59 = arith.addf %51, %58 : vector<16x256xf32>
    %60 = vector.extract_strided_slice %3 {offsets = [0, 7, 0], sizes = [16, 1, 16], strides = [1, 1, 1]} : vector<16x8x16xf32> to vector<16x1x16xf32>
    %61 = vector.broadcast %60 : vector<16x1x16xf32> to vector<16x8x16xf32>
    %62 = arith.mulf %61, %3 : vector<16x8x16xf32>
    %cst_35 = arith.constant dense<0.000000e+00> : vector<16x8xf32>
    %63 = vector.multi_reduction <add>, %62, %cst_35 [2] : vector<16x8x16xf32> to vector<16x8xf32>
    %c7 = arith.constant 7 : index
    %c0_36 = arith.constant 0 : index
    %c0_37 = arith.constant 0 : index
    %64 = vector.load %arg4[%c7, %c0_36, %c0_37] : memref<8x8x256xf32, #tpu.memory_space<vmem>>, vector<1x8x256xf32>
    %65 = vector.shape_cast %64 : vector<1x8x256xf32> to vector<8x256xf32>
    %cst_38 = arith.constant dense<0.000000e+00> : vector<16x256xf32>
    %66 = tpu.matmul %63, %65, %cst_38 {dimension_numbers = #tpu.dot_dimension_numbers<[1], [0], [0], [1], [0, 0, 1, 1], [], []>} : vector<16x8xf32>, vector<8x256xf32>, vector<16x256xf32> -> vector<16x256xf32>
    %67 = arith.addf %59, %66 : vector<16x256xf32>
    %c0_39 = arith.constant 0 : index
    %c0_40 = arith.constant 0 : index
    %68 = vector.load %arg5[%c0_39, %c0_40] : memref<1x256xf32, #tpu.memory_space<vmem>>, vector<1x256xf32>
    %69 = vector.broadcast %68 : vector<1x256xf32> to vector<16x256xf32>
    %70 = arith.addf %67, %69 : vector<16x256xf32>
    %c0_41 = arith.constant 0 : index
    %c0_42 = arith.constant 0 : index
    %71 = vector.load %arg6[%c0_41, %c0_42] : memref<16x256xf32, #tpu.memory_space<vmem>>, vector<16x256xf32>
    tpu.vector_store %arg6[%c0_41, %c0_42], %70 {strides = array<i32>} : memref<16x256xf32, #tpu.memory_space<vmem>>, vector<16x256xf32>,
    return
  }
  func.func @transform_0(%arg0: i32) -> (i32, i32) {
    %c0_i32 = arith.constant 0 : i32
    %c0_i32_0 = arith.constant 0 : i32
    return %arg0, %c0_i32 : i32, i32
  }
  func.func @transform_1(%arg0: i32) -> (i32, i32, i32) {
    %c0_i32 = arith.constant 0 : i32
    %c0_i32_0 = arith.constant 0 : i32
    %c0_i32_1 = arith.constant 0 : i32
    return %arg0, %c0_i32, %c0_i32_0 : i32, i32, i32
  }
  func.func @transform_2(%arg0: i32) -> (i32, i32) {
    %c0_i32 = arith.constant 0 : i32
    %c0_i32_0 = arith.constant 0 : i32
    %c0_i32_1 = arith.constant 0 : i32
    return %c0_i32, %c0_i32_0 : i32, i32
  }
  func.func @transform_3(%arg0: i32) -> (i32, i32, i32) {
    %c0_i32 = arith.constant 0 : i32
    %c0_i32_0 = arith.constant 0 : i32
    %c0_i32_1 = arith.constant 0 : i32
    %c0_i32_2 = arith.constant 0 : i32
    return %c0_i32, %c0_i32_0, %c0_i32_1 : i32, i32, i32
  }
  func.func @transform_4(%arg0: i32) -> (i32, i32) {
    %c0_i32 = arith.constant 0 : i32
    %c0_i32_0 = arith.constant 0 : i32
    %c0_i32_1 = arith.constant 0 : i32
    return %c0_i32, %c0_i32_0 : i32, i32
  }
  func.func @transform_5(%arg0: i32) -> (i32, i32) {
    %c0_i32 = arith.constant 0 : i32
    %c0_i32_0 = arith.constant 0 : i32
    return %arg0, %c0_i32 : i32, i32
  }
}

</mosaic_0001>

<llo_original>
// kernel: tpu_custom_call.1
$region0: #{tpu_custom_call.1}
  #allocation0 [shape = 'u32[]', space=smem, size = 0x4, offset = 0x4, fixed_abs, tag = 'smem constant byte address 0x4 - core index']
  #allocation1 [shape = 'u32[72,128]{1,0:T(1,128)}', space=vmem, size = 0x9000, scoped, tag = 'internal scratch']
  %s0 = inlined_call_operand.hbm [shape: f32[16,128], index: 0, kind: input, shape index: {}]
  %s1 = inlined_call_operand.hbm [shape: f32[16,8,16], index: 1, kind: input, shape index: {}]
  %s2 = inlined_call_operand.hbm [shape: f32[128,256], index: 2, kind: input, shape index: {}]
  %s3 = inlined_call_operand.hbm [shape: f32[8,8,256], index: 3, kind: input, shape index: {}]
  %s4 = inlined_call_operand.vmem [shape: f32[1,256], index: 4, kind: input, shape index: {}]
  %s5 = inlined_call_operand.hbm [shape: f32[16,256], index: 5, kind: output, shape index: {}]
  %s6 = sld [smem:[#allocation0]]
  $region46: #{tpu_custom_call.1} parent=0
    _
  %s8 = ssub.s32 1, %s6
  %s9 = scalar_select 0, %s8, %s6
  $region1: #{tpu_custom_call.1} parent=0
    #allocation2 [shape = 'u8[8192]{0}', space=vmem, size = 0x2000, scoped, tag = 'input window, operand 0, single buffered']
    #allocation3 [shape = 's32[1]{0}', space=sflag, size = 0x4, scoped, tag = 'scoped memory for tpu_custom_call.1']
    #allocation4 [shape = 's32[1]{0}', space=sflag, size = 0x4, scoped, tag = 'scoped memory for tpu_custom_call.1']
    #allocation5 [shape = 'u8[65536]{0}', space=vmem, size = 0x10000, scoped, tag = 'input window, operand 1, single buffered']
    #allocation6 [shape = 's32[1]{0}', space=sflag, size = 0x4, scoped, tag = 'scoped memory for tpu_custom_call.1']
    #allocation7 [shape = 'u8[131072]{0}', space=vmem, size = 0x20000, scoped, tag = 'input window, operand 2, single buffered']
    #allocation8 [shape = 'u8[65536]{0}', space=vmem, size = 0x10000, scoped, tag = 'input window, operand 3, single buffered']
    #allocation9 [shape = 's32[1]{0}', space=sflag, size = 0x4, scoped, tag = 'scoped memory for tpu_custom_call.1']
    #allocation10 [shape = 'u8[16384]{0}', space=vmem, size = 0x4000, scoped, tag = 'output window, operand 0, single buffered']
    %10 = vsyncpa [#allocation3], 0
    %11 = vsyncpa [#allocation6], 0
    %12 = vsyncpa [#allocation9], 0
    %13 = vsyncpa [#allocation4], 0
    // Predicated region
    $region2: #{tpu_custom_call.1} parent=1 // pred_check
      _
    $region3: #{tpu_custom_call.1} parent=1 // pred_check_branch
      %15 = sbr.rel (0) target = $region5
    $region4: #{tpu_custom_call.1} parent=1 // pred_region
      %17 = vsyncadd [#allocation3], 0
      %s18 = sshll.u32 %s0, 4
      %s19 = int_to_ptr.hbm [resolvable:$true] %s18
      %s20 = sshll.u32 [#allocation2], 4
      %s21 = int_to_ptr.vmem [resolvable:$true] %s20
      %26 = dma.hbm_to_vmem [thread:$0]  %s19, 256, %s21, [#allocation3], 128, 128, 8
    $region5: #{tpu_custom_call.1} parent=1 // pred_fallthru
      _
    // Predicated region
    $region6: #{tpu_custom_call.1} parent=1 // pred_check
      _
    $region7: #{tpu_custom_call.1} parent=1 // pred_check_branch
      %28 = sbr.rel (0) target = $region9
    $region8: #{tpu_custom_call.1} parent=1 // pred_region
      %30 = vsyncadd [#allocation6], 0
      %s31 = sshll.u32 %s1, 4
      %s32 = int_to_ptr.hbm [resolvable:$true] %s31
      %s33 = sshll.u32 [#allocation5], 4
      %s34 = int_to_ptr.vmem [resolvable:$true] %s33
      %39 = dma.hbm_to_vmem [thread:$0]  %s32, 2048, %s34, [#allocation6], 128, 128, 8
    $region9: #{tpu_custom_call.1} parent=1 // pred_fallthru
      _
    // Predicated region
    $region10: #{tpu_custom_call.1} parent=1 // pred_check
      _
    $region11: #{tpu_custom_call.1} parent=1 // pred_check_branch
      %41 = sbr.rel (0) target = $region13
    $region12: #{tpu_custom_call.1} parent=1 // pred_region
      %43 = vsyncadd [#allocation6], 0
      %s44 = sshll.u32 %s2, 4
      %s45 = int_to_ptr.hbm [resolvable:$true] %s44
      %s46 = sshll.u32 [#allocation7], 4
      %s47 = int_to_ptr.vmem [resolvable:$true] %s46
      %52 = dma.hbm_to_vmem [thread:$0]  %s45, 4096, %s47, [#allocation6], 256, 256, 16
    $region13: #{tpu_custom_call.1} parent=1 // pred_fallthru
      _
    // Predicated region
    $region14: #{tpu_custom_call.1} parent=1 // pred_check
      _
    $region15: #{tpu_custom_call.1} parent=1 // pred_check_branch
      %54 = sbr.rel (0) target = $region17
    $region16: #{tpu_custom_call.1} parent=1 // pred_region
      %56 = vsyncadd [#allocation9], 0
      %s57 = sshll.u32 %s3, 4
      %s58 = int_to_ptr.hbm [resolvable:$true] %s57
      %s59 = sshll.u32 [#allocation8], 4
      %s60 = int_to_ptr.vmem [resolvable:$true] %s59
      %65 = dma.hbm_to_vmem [thread:$0]  %s58, 2048, %s60, [#allocation9], 256, 256, 16
    $region17: #{tpu_custom_call.1} parent=1 // pred_fallthru
      _
    // Predicated region
    $region18: #{tpu_custom_call.1} parent=1 // pred_check
      _
    $region19: #{tpu_custom_call.1} parent=1 // pred_check_branch
      %67 = sbr.rel (0) target = $region21
    $region20: #{tpu_custom_call.1} parent=1 // pred_region
      _
    $region21: #{tpu_custom_call.1} parent=1 // pred_fallthru
      _
    // Predicated region
    $region22: #{tpu_custom_call.1} parent=1 // pred_check
      _
    $region23: #{tpu_custom_call.1} parent=1 // pred_check_branch
      %69 = sbr.rel (0) target = $region25
    $region24: #{tpu_custom_call.1} parent=1 // pred_region
      %71 = dma.done [#allocation3], 256
    $region25: #{tpu_custom_call.1} parent=1 // pred_fallthru
      _
    // Predicated region
    $region26: #{tpu_custom_call.1} parent=1 // pred_check
      _
    $region27: #{tpu_custom_call.1} parent=1 // pred_check_branch
      %73 = sbr.rel (0) target = $region29
    $region28: #{tpu_custom_call.1} parent=1 // pred_region
      %75 = dma.done [#allocation6], 2048
    $region29: #{tpu_custom_call.1} parent=1 // pred_fallthru
      _
    // Predicated region
    $region30: #{tpu_custom_call.1} parent=1 // pred_check
      _
    $region31: #{tpu_custom_call.1} parent=1 // pred_check_branch
      %77 = sbr.rel (0) target = $region33
    $region32: #{tpu_custom_call.1} parent=1 // pred_region
      %79 = dma.done [#allocation6], 4096
    $region33: #{tpu_custom_call.1} parent=1 // pred_fallthru
      _
    // Predicated region
    $region34: #{tpu_custom_call.1} parent=1 // pred_check
      _
    $region35: #{tpu_custom_call.1} parent=1 // pred_check_branch
      %81 = sbr.rel (0) target = $region37
    $region36: #{tpu_custom_call.1} parent=1 // pred_region
      %83 = dma.done [#allocation9], 2048
    $region37: #{tpu_custom_call.1} parent=1 // pred_fallthru
      _
    %v84 = vld [vmem:[#allocation2] sm:$0xff]
    %v85 = vld [vmem:[#allocation2 + $0x8] sm:$0xff]
    %v86 = vld [vmem:[#allocation7] sm:$0xff]
    %v87 = vld [vmem:[#allocation7 + $0x8] sm:$0xff]
    %v88 = vld [vmem:[#allocation7 + $0x10] sm:$0xff]
    %v89 = vld [vmem:[#allocation7 + $0x18] sm:$0xff]
    %v90 = vld [vmem:[#allocation7 + $0x20] sm:$0xff]
    %v91 = vld [vmem:[#allocation7 + $0x28] sm:$0xff]
    %v92 = vld [vmem:[#allocation7 + $0x30] sm:$0xff]
    %v93 = vld [vmem:[#allocation7 + $0x38] sm:$0xff]
    %v94 = vld [vmem:[#allocation7 + $0x40] sm:$0xff]
    %v95 = vld [vmem:[#allocation7 + $0x48] sm:$0xff]
    %v96 = vld [vmem:[#allocation7 + $0x50] sm:$0xff]
    %v97 = vld [vmem:[#allocation7 + $0x58] sm:$0xff]
    %v98 = vld [vmem:[#allocation7 + $0x60] sm:$0xff]
    %v99 = vld [vmem:[#allocation7 + $0x68] sm:$0xff]
    %v100 = vld [vmem:[#allocation7 + $0x70] sm:$0xff]
    %v101 = vld [vmem:[#allocation7 + $0x78] sm:$0xff]
    %v102 = vld [vmem:[#allocation7 + $0x80] sm:$0xff]
    %v103 = vld [vmem:[#allocation7 + $0x88] sm:$0xff]
    %v104 = vld [vmem:[#allocation7 + $0x90] sm:$0xff]
    %v105 = vld [vmem:[#allocation7 + $0x98] sm:$0xff]
    %v106 = vld [vmem:[#allocation7 + $0xa0] sm:$0xff]
    %v107 = vld [vmem:[#allocation7 + $0xa8] sm:$0xff]
    %v108 = vld [vmem:[#allocation7 + $0xb0] sm:$0xff]
    %v109 = vld [vmem:[#allocation7 + $0xb8] sm:$0xff]
    %v110 = vld [vmem:[#allocation7 + $0xc0] sm:$0xff]
    %v111 = vld [vmem:[#allocation7 + $0xc8] sm:$0xff]
    %v112 = vld [vmem:[#allocation7 + $0xd0] sm:$0xff]
    %v113 = vld [vmem:[#allocation7 + $0xd8] sm:$0xff]
    %v114 = vld [vmem:[#allocation7 + $0xe0] sm:$0xff]
    %v115 = vld [vmem:[#allocation7 + $0xe8] sm:$0xff]
    %v116 = vld [vmem:[#allocation7 + $0xf0] sm:$0xff]
    %v117 = vld [vmem:[#allocation7 + $0xf8] sm:$0xff]
    %v118 = vld [vmem:[#allocation5] sm:$0xff]
    %v119 = vld [vmem:[#allocation5 + $0x8] sm:$0xff]
    %v120 = vld [vmem:[#allocation5 + $0x10] sm:$0xff]
    %v121 = vld [vmem:[#allocation5 + $0x18] sm:$0xff]
    %v122 = vld [vmem:[#allocation5 + $0x20] sm:$0xff]
    %v123 = vld [vmem:[#allocation5 + $0x28] sm:$0xff]
    %v124 = vld [vmem:[#allocation5 + $0x30] sm:$0xff]
    %v125 = vld [vmem:[#allocation5 + $0x38] sm:$0xff]
    %v126 = vld [vmem:[#allocation5 + $0x40] sm:$0xff]
    %v127 = vld [vmem:[#allocation5 + $0x48] sm:$0xff]
    %v128 = vld [vmem:[#allocation5 + $0x50] sm:$0xff]
    %v129 = vld [vmem:[#allocation5 + $0x58] sm:$0xff]
    %v130 = vld [vmem:[#allocation5 + $0x60] sm:$0xff]
    %v131 = vld [vmem:[#allocation5 + $0x68] sm:$0xff]
    %v132 = vld [vmem:[#allocation5 + $0x70] sm:$0xff]
    %v133 = vld [vmem:[#allocation5 + $0x78] sm:$0xff]
    %v134 = vperm.slane %v118, 0
    %v135 = vperm.slane %v119, 0
    %v136 = vperm.slane %v120, 0
    %v137 = vperm.slane %v121, 0
    %v138 = vperm.slane %v122, 0
    %v139 = vperm.slane %v123, 0
    %v140 = vperm.slane %v124, 0
    %v141 = vperm.slane %v125, 0
    %v142 = vperm.slane %v126, 0
    %v143 = vperm.slane %v127, 0
    %v144 = vperm.slane %v128, 0
    %v145 = vperm.slane %v129, 0
    %v146 = vperm.slane %v130, 0
    %v147 = vperm.slane %v131, 0
    %v148 = vperm.slane %v132, 0
    %v149 = vperm.slane %v133, 0
    %v150 = vmul.f32 %v134, %v118
    %v151 = vmul.f32 %v135, %v119
    %v152 = vmul.f32 %v136, %v120
    %v153 = vmul.f32 %v137, %v121
    %v154 = vmul.f32 %v138, %v122
    %v155 = vmul.f32 %v139, %v123
    %v156 = vmul.f32 %v140, %v124
    %v157 = vmul.f32 %v141, %v125
    %v158 = vmul.f32 %v142, %v126
    %v159 = vmul.f32 %v143, %v127
    %v160 = vmul.f32 %v144, %v128
    %v161 = vmul.f32 %v145, %v129
    %v162 = vmul.f32 %v146, %v130
    %v163 = vmul.f32 %v147, %v131
    %v164 = vmul.f32 %v148, %v132
    %v165 = vmul.f32 %v149, %v133
    %vm166 = vcmask 130048
    %v167 = vsel %vm166, %v150, 0.0
    %168 = vadd.xlane.f32.xlu0 %v167
    %v169 = vpop.xlane.xlu0 %168
    %v170 = vsel %vm166, %v151, 0.0
    %171 = vadd.xlane.f32.xlu0 %v170
    %v172 = vpop.xlane.xlu0 %171
    %v173 = vsel %vm166, %v152, 0.0
    %174 = vadd.xlane.f32.xlu0 %v173
    %v175 = vpop.xlane.xlu0 %174
    %v176 = vsel %vm166, %v153, 0.0
    %177 = vadd.xlane.f32.xlu0 %v176
    %v178 = vpop.xlane.xlu0 %177
    %v179 = vsel %vm166, %v154, 0.0
    %180 = vadd.xlane.f32.xlu0 %v179
    %v181 = vpop.xlane.xlu0 %180
    %v182 = vsel %vm166, %v155, 0.0
    %183 = vadd.xlane.f32.xlu0 %v182
    %v184 = vpop.xlane.xlu0 %183
    %v185 = vsel %vm166, %v156, 0.0
    %186 = vadd.xlane.f32.xlu0 %v185
    %v187 = vpop.xlane.xlu0 %186
    %v188 = vsel %vm166, %v157, 0.0
    %189 = vadd.xlane.f32.xlu0 %v188
    %v190 = vpop.xlane.xlu0 %189
    %v191 = vsel %vm166, %v158, 0.0
    %192 = vadd.xlane.f32.xlu0 %v191
    %v193 = vpop.xlane.xlu0 %192
    %v194 = vsel %vm166, %v159, 0.0
    %195 = vadd.xlane.f32.xlu0 %v194
    %v196 = vpop.xlane.xlu0 %195
    %v197 = vsel %vm166, %v160, 0.0
    %198 = vadd.xlane.f32.xlu0 %v197
    %v199 = vpop.xlane.xlu0 %198
    %v200 = vsel %vm166, %v161, 0.0
    %201 = vadd.xlane.f32.xlu0 %v200
    %v202 = vpop.xlane.xlu0 %201
    %v203 = vsel %vm166, %v162, 0.0
    %204 = vadd.xlane.f32.xlu0 %v203
    %v205 = vpop.xlane.xlu0 %204
    %v206 = vsel %vm166, %v163, 0.0
    %207 = vadd.xlane.f32.xlu0 %v206
    %v208 = vpop.xlane.xlu0 %207
    %v209 = vsel %vm166, %v164, 0.0
    %210 = vadd.xlane.f32.xlu0 %v209
    %v211 = vpop.xlane.xlu0 %210
    %v212 = vsel %vm166, %v165, 0.0
    %213 = vadd.xlane.f32.xlu0 %v212
    %v214 = vpop.xlane.xlu0 %213
    %v215 = vld [vmem:[#allocation8] sm:$0xff]
    %v216 = vld [vmem:[#allocation8 + $0x8] sm:$0xff]
    %v233 = vlaneseq
    %v234 = vand.u32 %v233, 127
    %v235 = vperm.slane %v169, %v234
    %v236 = vperm.slane %v172, %v234
    %v237 = vperm.slane %v175, %v234
    %v238 = vperm.slane %v178, %v234
    %v239 = vperm.slane %v181, %v234
    %v240 = vperm.slane %v184, %v234
    %v241 = vperm.slane %v187, %v234
    %v242 = vperm.slane %v190, %v234
    %v243 = vperm.slane %v193, %v234
    %v244 = vperm.slane %v196, %v234
    %v245 = vperm.slane %v199, %v234
    %v246 = vperm.slane %v202, %v234
    %v247 = vperm.slane %v205, %v234
    %v248 = vperm.slane %v208, %v234
    %v249 = vperm.slane %v211, %v234
    %v250 = vperm.slane %v214, %v234
    %vm251 = vcmask 1041409
    %v252 = vsel %vm251, %v236, %v235
    %vm253 = vcmask 1042434
    %v254 = vsel %vm253, %v237, %v252
    %vm255 = vcmask 1043459
    %v256 = vsel %vm255, %v238, %v254
    %vm257 = vcmask 1044484
    %v258 = vsel %vm257, %v239, %v256
    %vm259 = vcmask 1045509
    %v260 = vsel %vm259, %v240, %v258
    %vm261 = vcmask 1046534
    %v262 = vsel %vm261, %v241, %v260
    %vm263 = vcmask 1047559
    %v264 = vsel %vm263, %v242, %v262
    %v265 = vsel %vm251, %v244, %v243
    %v266 = vsel %vm253, %v245, %v265
    %v267 = vsel %vm255, %v246, %v266
    %v268 = vsel %vm257, %v247, %v267
    %v269 = vsel %vm259, %v248, %v268
    %v270 = vsel %vm261, %v249, %v269
    %v271 = vsel %vm263, %v250, %v270
    %vm272 = vcmask 64512
    %v273 = vsel %vm272, %v264, 0
    %v275 = vsel %vm272, %v271, 0
    %277 = vmatpush.msra.mxu0 0.0
    %278 = vmatpush.msra.mxu0 0.0
    %279 = vmatpush.msra.mxu0 0.0
    %280 = vmatpush.msra.mxu0 0.0
    %281 = vmatpush.msra.mxu0 0.0
    %282 = vmatpush.msra.mxu0 0.0
    %283 = vmatpush.msra.mxu0 0.0
    %284 = vmatpush.msra.mxu0 0.0
    %285 = vmatpush.msra.mxu0 0.0
    %286 = vmatpush.msra.mxu0 0.0
    %287 = vmatpush.msra.mxu0 0.0
    %288 = vmatpush.msra.mxu0 0.0
    %289 = vmatpush.msra.mxu0 0.0
    %290 = vmatpush.msra.mxu0 0.0
    %291 = vmatpush.msra.mxu0 0.0
    %292 = vmatpush.msra.mxu0 %v215
    %293 = vmatmul.f32.gmra.mxu0 %v273
    %v294 = vpop.f32.mrf.mxu0
    %v295 = vadd.f32 0.0, %v294
    %296 = vmatmul.f32.gmra.mxu0 %v275
    %v297 = vpop.f32.mrf.mxu0
    %v298 = vadd.f32 0.0, %v297
    %299 = vdwg.mxu0
    %300 = vmatpush.msra.mxu0 0.0
    %301 = vmatpush.msra.mxu0 0.0
    %302 = vmatpush.msra.mxu0 0.0
    %303 = vmatpush.msra.mxu0 0.0
    %304 = vmatpush.msra.mxu0 0.0
    %305 = vmatpush.msra.mxu0 0.0
    %306 = vmatpush.msra.mxu0 0.0
    %307 = vmatpush.msra.mxu0 0.0
    %308 = vmatpush.msra.mxu0 0.0
    %309 = vmatpush.msra.mxu0 0.0
    %310 = vmatpush.msra.mxu0 0.0
    %311 = vmatpush.msra.mxu0 0.0
    %312 = vmatpush.msra.mxu0 0.0
    %313 = vmatpush.msra.mxu0 0.0
    %314 = vmatpush.msra.mxu0 0.0
    %315 = vmatpush.msra.mxu0 %v216
    %316 = vmatmul.f32.gmra.mxu0 %v273
    %v317 = vpop.f32.mrf.mxu0
    %v318 = vadd.f32 0.0, %v317
    %319 = vmatmul.f32.gmra.mxu0 %v275
    %v320 = vpop.f32.mrf.mxu0
    %v321 = vadd.f32 0.0, %v320
    %322 = vdwg.mxu0
    %323 = vmatpush.msra.mxu0 %v116
    %324 = vmatpush.msra.mxu0 %v114
    %325 = vmatpush.msra.mxu0 %v112
    %326 = vmatpush.msra.mxu0 %v110
    %327 = vmatpush.msra.mxu0 %v108
    %328 = vmatpush.msra.mxu0 %v106
    %329 = vmatpush.msra.mxu0 %v104
    %330 = vmatpush.msra.mxu0 %v102
    %331 = vmatpush.msra.mxu0 %v100
    %332 = vmatpush.msra.mxu0 %v98
    %333 = vmatpush.msra.mxu0 %v96
    %334 = vmatpush.msra.mxu0 %v94
    %335 = vmatpush.msra.mxu0 %v92
    %336 = vmatpush.msra.mxu0 %v90
    %337 = vmatpush.msra.mxu0 %v88
    %338 = vmatpush.msra.mxu0 %v86
    %339 = vmatmul.f32.gmra.mxu0 %v84
    %v340 = vpop.f32.mrf.mxu0
    %v341 = vadd.f32 %v295, %v340
    %342 = vmatmul.f32.gmra.mxu0 %v85
    %v343 = vpop.f32.mrf.mxu0
    %v344 = vadd.f32 %v298, %v343
    %345 = vdwg.mxu0
    %346 = vmatpush.msra.mxu0 %v117
    %347 = vmatpush.msra.mxu0 %v115
    %348 = vmatpush.msra.mxu0 %v113
    %349 = vmatpush.msra.mxu0 %v111
    %350 = vmatpush.msra.mxu0 %v109
    %351 = vmatpush.msra.mxu0 %v107
    %352 = vmatpush.msra.mxu0 %v105
    %353 = vmatpush.msra.mxu0 %v103
    %354 = vmatpush.msra.mxu0 %v101
    %355 = vmatpush.msra.mxu0 %v99
    %356 = vmatpush.msra.mxu0 %v97
    %357 = vmatpush.msra.mxu0 %v95
    %358 = vmatpush.msra.mxu0 %v93
    %359 = vmatpush.msra.mxu0 %v91
    %360 = vmatpush.msra.mxu0 %v89
    %361 = vmatpush.msra.mxu0 %v87
    %362 = vmatmul.f32.gmra.mxu0 %v84
    %v363 = vpop.f32.mrf.mxu0
    %v364 = vadd.f32 %v318, %v363
    %365 = vmatmul.f32.gmra.mxu0 %v85
    %v366 = vpop.f32.mrf.mxu0
    %v367 = vadd.f32 %v321, %v366
    %368 = vdwg.mxu0
    %v369 = vperm.slane %v118, 1
    %v370 = vperm.slane %v119, 1
    %v371 = vperm.slane %v120, 1
    %v372 = vperm.slane %v121, 1
    %v373 = vperm.slane %v122, 1
    %v374 = vperm.slane %v123, 1
    %v375 = vperm.slane %v124, 1
    %v376 = vperm.slane %v125, 1
    %v377 = vperm.slane %v126, 1
    %v378 = vperm.slane %v127, 1
    %v379 = vperm.slane %v128, 1
    %v380 = vperm.slane %v129, 1
    %v381 = vperm.slane %v130, 1
    %v382 = vperm.slane %v131, 1
    %v383 = vperm.slane %v132, 1
    %v384 = vperm.slane %v133, 1
    %v385 = vmul.f32 %v369, %v118
    %v386 = vmul.f32 %v370, %v119
    %v387 = vmul.f32 %v371, %v120
    %v388 = vmul.f32 %v372, %v121
    %v389 = vmul.f32 %v373, %v122
    %v390 = vmul.f32 %v374, %v123
    %v391 = vmul.f32 %v375, %v124
    %v392 = vmul.f32 %v376, %v125
    %v393 = vmul.f32 %v377, %v126
    %v394 = vmul.f32 %v378, %v127
    %v395 = vmul.f32 %v379, %v128
    %v396 = vmul.f32 %v380, %v129
    %v397 = vmul.f32 %v381, %v130
    %v398 = vmul.f32 %v382, %v131
    %v399 = vmul.f32 %v383, %v132
    %v400 = vmul.f32 %v384, %v133
    %v401 = vsel %vm166, %v385, 0.0
    %402 = vadd.xlane.f32.xlu0 %v401
    %v403 = vpop.xlane.xlu0 %402
    %v404 = vsel %vm166, %v386, 0.0
    %405 = vadd.xlane.f32.xlu0 %v404
    %v406 = vpop.xlane.xlu0 %405
    %v407 = vsel %vm166, %v387, 0.0
    %408 = vadd.xlane.f32.xlu0 %v407
    %v409 = vpop.xlane.xlu0 %408
    %v410 = vsel %vm166, %v388, 0.0
    %411 = vadd.xlane.f32.xlu0 %v410
    %v412 = vpop.xlane.xlu0 %411
    %v413 = vsel %vm166, %v389, 0.0
    %414 = vadd.xlane.f32.xlu0 %v413
    %v415 = vpop.xlane.xlu0 %414
    %v416 = vsel %vm166, %v390, 0.0
    %417 = vadd.xlane.f32.xlu0 %v416
    %v418 = vpop.xlane.xlu0 %417
    %v419 = vsel %vm166, %v391, 0.0
    %420 = vadd.xlane.f32.xlu0 %v419
    %v421 = vpop.xlane.xlu0 %420
    %v422 = vsel %vm166, %v392, 0.0
    %423 = vadd.xlane.f32.xlu0 %v422
    %v424 = vpop.xlane.xlu0 %423
    %v425 = vsel %vm166, %v393, 0.0
    %426 = vadd.xlane.f32.xlu0 %v425
    %v427 = vpop.xlane.xlu0 %426
    %v428 = vsel %vm166, %v394, 0.0
    %429 = vadd.xlane.f32.xlu0 %v428
    %v430 = vpop.xlane.xlu0 %429
    %v431 = vsel %vm166, %v395, 0.0
    %432 = vadd.xlane.f32.xlu0 %v431
    %v433 = vpop.xlane.xlu0 %432
    %v434 = vsel %vm166, %v396, 0.0
    %435 = vadd.xlane.f32.xlu0 %v434
    %v436 = vpop.xlane.xlu0 %435
    %v437 = vsel %vm166, %v397, 0.0
    %438 = vadd.xlane.f32.xlu0 %v437
    %v439 = vpop.xlane.xlu0 %438
    %v440 = vsel %vm166, %v398, 0.0
    %441 = vadd.xlane.f32.xlu0 %v440
    %v442 = vpop.xlane.xlu0 %441
    %v443 = vsel %vm166, %v399, 0.0
    %444 = vadd.xlane.f32.xlu0 %v443
    %v445 = vpop.xlane.xlu0 %444
    %v446 = vsel %vm166, %v400, 0.0
    %447 = vadd.xlane.f32.xlu0 %v446
    %v448 = vpop.xlane.xlu0 %447
    %s449 = scalar_lea.vmem [#allocation8], 16
    %v450 = vld [vmem:[%s449] sm:$0xff]
    %v451 = vld [vmem:[%s449 + $0x8] sm:$0xff]
    %v468 = vperm.slane %v403, %v234
    %v469 = vperm.slane %v406, %v234
    %v470 = vperm.slane %v409, %v234
    %v471 = vperm.slane %v412, %v234
    %v472 = vperm.slane %v415, %v234
    %v473 = vperm.slane %v418, %v234
    %v474 = vperm.slane %v421, %v234
    %v475 = vperm.slane %v424, %v234
    %v476 = vperm.slane %v427, %v234
    %v477 = vperm.slane %v430, %v234
    %v478 = vperm.slane %v433, %v234
    %v479 = vperm.slane %v436, %v234
    %v480 = vperm.slane %v439, %v234
    %v481 = vperm.slane %v442, %v234
    %v482 = vperm.slane %v445, %v234
    %v483 = vperm.slane %v448, %v234
    %v484 = vsel %vm251, %v469, %v468
    %v485 = vsel %vm253, %v470, %v484
    %v486 = vsel %vm255, %v471, %v485
    %v487 = vsel %vm257, %v472, %v486
    %v488 = vsel %vm259, %v473, %v487
    %v489 = vsel %vm261, %v474, %v488
    %v490 = vsel %vm263, %v475, %v489
    %v491 = vsel %vm251, %v477, %v476
    %v492 = vsel %vm253, %v478, %v491
    %v493 = vsel %vm255, %v479, %v492
    %v494 = vsel %vm257, %v480, %v493
    %v495 = vsel %vm259, %v481, %v494
    %v496 = vsel %vm261, %v482, %v495
    %v497 = vsel %vm263, %v483, %v496
    %v498 = vsel %vm272, %v490, 0
    %v500 = vsel %vm272, %v497, 0
    %502 = vmatpush.msra.mxu0 0.0
    %503 = vmatpush.msra.mxu0 0.0
    %504 = vmatpush.msra.mxu0 0.0
    %505 = vmatpush.msra.mxu0 0.0
    %506 = vmatpush.msra.mxu0 0.0
    %507 = vmatpush.msra.mxu0 0.0
    %508 = vmatpush.msra.mxu0 0.0
    %509 = vmatpush.msra.mxu0 0.0
    %510 = vmatpush.msra.mxu0 0.0
    %511 = vmatpush.msra.mxu0 0.0
    %512 = vmatpush.msra.mxu0 0.0
    %513 = vmatpush.msra.mxu0 0.0
    %514 = vmatpush.msra.mxu0 0.0
    %515 = vmatpush.msra.mxu0 0.0
    %516 = vmatpush.msra.mxu0 0.0
    %517 = vmatpush.msra.mxu0 %v450
    %518 = vmatmul.f32.gmra.mxu0 %v498
    %v519 = vpop.f32.mrf.mxu0
    %v520 = vadd.f32 0.0, %v519
    %521 = vmatmul.f32.gmra.mxu0 %v500
    %v522 = vpop.f32.mrf.mxu0
    %v523 = vadd.f32 0.0, %v522
    %524 = vdwg.mxu0
    %525 = vmatpush.msra.mxu0 0.0
    %526 = vmatpush.msra.mxu0 0.0
    %527 = vmatpush.msra.mxu0 0.0
    %528 = vmatpush.msra.mxu0 0.0
    %529 = vmatpush.msra.mxu0 0.0
    %530 = vmatpush.msra.mxu0 0.0
    %531 = vmatpush.msra.mxu0 0.0
    %532 = vmatpush.msra.mxu0 0.0
    %533 = vmatpush.msra.mxu0 0.0
    %534 = vmatpush.msra.mxu0 0.0
    %535 = vmatpush.msra.mxu0 0.0
    %536 = vmatpush.msra.mxu0 0.0
    %537 = vmatpush.msra.mxu0 0.0
    %538 = vmatpush.msra.mxu0 0.0
    %539 = vmatpush.msra.mxu0 0.0
    %540 = vmatpush.msra.mxu0 %v451
    %541 = vmatmul.f32.gmra.mxu0 %v498
    %v542 = vpop.f32.mrf.mxu0
    %v543 = vadd.f32 0.0, %v542
    %544 = vmatmul.f32.gmra.mxu0 %v500
    %v545 = vpop.f32.mrf.mxu0
    %v546 = vadd.f32 0.0, %v545
    %547 = vdwg.mxu0
    %v548 = vadd.f32 %v341, %v520
    %v549 = vadd.f32 %v364, %v543
    %v550 = vadd.f32 %v344, %v523
    %v551 = vadd.f32 %v367, %v546
    %v552 = vperm.slane %v118, 2
    %v553 = vperm.slane %v119, 2
    %v554 = vperm.slane %v120, 2
    %v555 = vperm.slane %v121, 2
    %v556 = vperm.slane %v122, 2
    %v557 = vperm.slane %v123, 2
    %v558 = vperm.slane %v124, 2
    %v559 = vperm.slane %v125, 2
    %v560 = vperm.slane %v126, 2
    %v561 = vperm.slane %v127, 2
    %v562 = vperm.slane %v128, 2
    %v563 = vperm.slane %v129, 2
    %v564 = vperm.slane %v130, 2
    %v565 = vperm.slane %v131, 2
    %v566 = vperm.slane %v132, 2
    %v567 = vperm.slane %v133, 2
    %v568 = vmul.f32 %v552, %v118
    %v569 = vmul.f32 %v553, %v119
    %v570 = vmul.f32 %v554, %v120
    %v571 = vmul.f32 %v555, %v121
    %v572 = vmul.f32 %v556, %v122
    %v573 = vmul.f32 %v557, %v123
    %v574 = vmul.f32 %v558, %v124
    %v575 = vmul.f32 %v559, %v125
    %v576 = vmul.f32 %v560, %v126
    %v577 = vmul.f32 %v561, %v127
    %v578 = vmul.f32 %v562, %v128
    %v579 = vmul.f32 %v563, %v129
    %v580 = vmul.f32 %v564, %v130
    %v581 = vmul.f32 %v565, %v131
    %v582 = vmul.f32 %v566, %v132
    %v583 = vmul.f32 %v567, %v133
    %v584 = vsel %vm166, %v568, 0.0
    %585 = vadd.xlane.f32.xlu0 %v584
    %v586 = vpop.xlane.xlu0 %585
    %v587 = vsel %vm166, %v569, 0.0
    %588 = vadd.xlane.f32.xlu0 %v587
    %v589 = vpop.xlane.xlu0 %588
    %v590 = vsel %vm166, %v570, 0.0
    %591 = vadd.xlane.f32.xlu0 %v590
    %v592 = vpop.xlane.xlu0 %591
    %v593 = vsel %vm166, %v571, 0.0
    %594 = vadd.xlane.f32.xlu0 %v593
    %v595 = vpop.xlane.xlu0 %594
    %v596 = vsel %vm166, %v572, 0.0
    %597 = vadd.xlane.f32.xlu0 %v596
    %v598 = vpop.xlane.xlu0 %597
    %v599 = vsel %vm166, %v573, 0.0
    %600 = vadd.xlane.f32.xlu0 %v599
    %v601 = vpop.xlane.xlu0 %600
    %v602 = vsel %vm166, %v574, 0.0
    %603 = vadd.xlane.f32.xlu0 %v602
    %v604 = vpop.xlane.xlu0 %603
    %v605 = vsel %vm166, %v575, 0.0
    %606 = vadd.xlane.f32.xlu0 %v605
    %v607 = vpop.xlane.xlu0 %606
    %v608 = vsel %vm166, %v576, 0.0
    %609 = vadd.xlane.f32.xlu0 %v608
    %v610 = vpop.xlane.xlu0 %609
    %v611 = vsel %vm166, %v577, 0.0
    %612 = vadd.xlane.f32.xlu0 %v611
    %v613 = vpop.xlane.xlu0 %612
    %v614 = vsel %vm166, %v578, 0.0
    %615 = vadd.xlane.f32.xlu0 %v614
    %v616 = vpop.xlane.xlu0 %615
    %v617 = vsel %vm166, %v579, 0.0
    %618 = vadd.xlane.f32.xlu0 %v617
    %v619 = vpop.xlane.xlu0 %618
    %v620 = vsel %vm166, %v580, 0.0
    %621 = vadd.xlane.f32.xlu0 %v620
    %v622 = vpop.xlane.xlu0 %621
    %v623 = vsel %vm166, %v581, 0.0
    %624 = vadd.xlane.f32.xlu0 %v623
    %v625 = vpop.xlane.xlu0 %624
    %v626 = vsel %vm166, %v582, 0.0
    %627 = vadd.xlane.f32.xlu0 %v626
    %v628 = vpop.xlane.xlu0 %627
    %v629 = vsel %vm166, %v583, 0.0
    %630 = vadd.xlane.f32.xlu0 %v629
    %v631 = vpop.xlane.xlu0 %630
    %s632 = scalar_lea.vmem [#allocation8], 32
    %v633 = vld [vmem:[%s632] sm:$0xff]
    %v634 = vld [vmem:[%s632 + $0x8] sm:$0xff]
    %v651 = vperm.slane %v586, %v234
    %v652 = vperm.slane %v589, %v234
    %v653 = vperm.slane %v592, %v234
    %v654 = vperm.slane %v595, %v234
    %v655 = vperm.slane %v598, %v234
    %v656 = vperm.slane %v601, %v234
    %v657 = vperm.slane %v604, %v234
    %v658 = vperm.slane %v607, %v234
    %v659 = vperm.slane %v610, %v234
    %v660 = vperm.slane %v613, %v234
    %v661 = vperm.slane %v616, %v234
    %v662 = vperm.slane %v619, %v234
    %v663 = vperm.slane %v622, %v234
    %v664 = vperm.slane %v625, %v234
    %v665 = vperm.slane %v628, %v234
    %v666 = vperm.slane %v631, %v234
    %v667 = vsel %vm251, %v652, %v651
    %v668 = vsel %vm253, %v653, %v667
    %v669 = vsel %vm255, %v654, %v668
    %v670 = vsel %vm257, %v655, %v669
    %v671 = vsel %vm259, %v656, %v670
    %v672 = vsel %vm261, %v657, %v671
    %v673 = vsel %vm263, %v658, %v672
    %v674 = vsel %vm251, %v660, %v659
    %v675 = vsel %vm253, %v661, %v674
    %v676 = vsel %vm255, %v662, %v675
    %v677 = vsel %vm257, %v663, %v676
    %v678 = vsel %vm259, %v664, %v677
    %v679 = vsel %vm261, %v665, %v678
    %v680 = vsel %vm263, %v666, %v679
    %v681 = vsel %vm272, %v673, 0
    %v683 = vsel %vm272, %v680, 0
    %685 = vmatpush.msra.mxu0 0.0
    %686 = vmatpush.msra.mxu0 0.0
    %687 = vmatpush.msra.mxu0 0.0
    %688 = vmatpush.msra.mxu0 0.0
    %689 = vmatpush.msra.mxu0 0.0
    %690 = vmatpush.msra.mxu0 0.0
    %691 = vmatpush.msra.mxu0 0.0
    %692 = vmatpush.msra.mxu0 0.0
    %693 = vmatpush.msra.mxu0 0.0
    %694 = vmatpush.msra.mxu0 0.0
    %695 = vmatpush.msra.mxu0 0.0
    %696 = vmatpush.msra.mxu0 0.0
    %697 = vmatpush.msra.mxu0 0.0
    %698 = vmatpush.msra.mxu0 0.0
    %699 = vmatpush.msra.mxu0 0.0
    %700 = vmatpush.msra.mxu0 %v633
    %701 = vmatmul.f32.gmra.mxu0 %v681
    %v702 = vpop.f32.mrf.mxu0
    %v703 = vadd.f32 0.0, %v702
    %704 = vmatmul.f32.gmra.mxu0 %v683
    %v705 = vpop.f32.mrf.mxu0
    %v706 = vadd.f32 0.0, %v705
    %707 = vdwg.mxu0
    %708 = vmatpush.msra.mxu0 0.0
    %709 = vmatpush.msra.mxu0 0.0
    %710 = vmatpush.msra.mxu0 0.0
    %711 = vmatpush.msra.mxu0 0.0
    %712 = vmatpush.msra.mxu0 0.0
    %713 = vmatpush.msra.mxu0 0.0
    %714 = vmatpush.msra.mxu0 0.0
    %715 = vmatpush.msra.mxu0 0.0
    %716 = vmatpush.msra.mxu0 0.0
    %717 = vmatpush.msra.mxu0 0.0
    %718 = vmatpush.msra.mxu0 0.0
    %719 = vmatpush.msra.mxu0 0.0
    %720 = vmatpush.msra.mxu0 0.0
    %721 = vmatpush.msra.mxu0 0.0
    %722 = vmatpush.msra.mxu0 0.0
    %723 = vmatpush.msra.mxu0 %v634
    %724 = vmatmul.f32.gmra.mxu0 %v681
    %v725 = vpop.f32.mrf.mxu0
    %v726 = vadd.f32 0.0, %v725
    %727 = vmatmul.f32.gmra.mxu0 %v683
    %v728 = vpop.f32.mrf.mxu0
    %v729 = vadd.f32 0.0, %v728
    %730 = vdwg.mxu0
    %v731 = vadd.f32 %v548, %v703
    %v732 = vadd.f32 %v549, %v726
    %v733 = vadd.f32 %v550, %v706
    %v734 = vadd.f32 %v551, %v729
    %v735 = vperm.slane %v118, 3
    %v736 = vperm.slane %v119, 3
    %v737 = vperm.slane %v120, 3
    %v738 = vperm.slane %v121, 3
    %v739 = vperm.slane %v122, 3
    %v740 = vperm.slane %v123, 3
    %v741 = vperm.slane %v124, 3
    %v742 = vperm.slane %v125, 3
    %v743 = vperm.slane %v126, 3
    %v744 = vperm.slane %v127, 3
    %v745 = vperm.slane %v128, 3
    %v746 = vperm.slane %v129, 3
    %v747 = vperm.slane %v130, 3
    %v748 = vperm.slane %v131, 3
    %v749 = vperm.slane %v132, 3
    %v750 = vperm.slane %v133, 3
    %v751 = vmul.f32 %v735, %v118
    %v752 = vmul.f32 %v736, %v119
    %v753 = vmul.f32 %v737, %v120
    %v754 = vmul.f32 %v738, %v121
    %v755 = vmul.f32 %v739, %v122
    %v756 = vmul.f32 %v740, %v123
    %v757 = vmul.f32 %v741, %v124
    %v758 = vmul.f32 %v742, %v125
    %v759 = vmul.f32 %v743, %v126
    %v760 = vmul.f32 %v744, %v127
    %v761 = vmul.f32 %v745, %v128
    %v762 = vmul.f32 %v746, %v129
    %v763 = vmul.f32 %v747, %v130
    %v764 = vmul.f32 %v748, %v131
    %v765 = vmul.f32 %v749, %v132
    %v766 = vmul.f32 %v750, %v133
    %v767 = vsel %vm166, %v751, 0.0
    %768 = vadd.xlane.f32.xlu0 %v767
    %v769 = vpop.xlane.xlu0 %768
    %v770 = vsel %vm166, %v752, 0.0
    %771 = vadd.xlane.f32.xlu0 %v770
    %v772 = vpop.xlane.xlu0 %771
    %v773 = vsel %vm166, %v753, 0.0
    %774 = vadd.xlane.f32.xlu0 %v773
    %v775 = vpop.xlane.xlu0 %774
    %v776 = vsel %vm166, %v754, 0.0
    %777 = vadd.xlane.f32.xlu0 %v776
    %v778 = vpop.xlane.xlu0 %777
    %v779 = vsel %vm166, %v755, 0.0
    %780 = vadd.xlane.f32.xlu0 %v779
    %v781 = vpop.xlane.xlu0 %780
    %v782 = vsel %vm166, %v756, 0.0
    %783 = vadd.xlane.f32.xlu0 %v782
    %v784 = vpop.xlane.xlu0 %783
    %v785 = vsel %vm166, %v757, 0.0
    %786 = vadd.xlane.f32.xlu0 %v785
    %v787 = vpop.xlane.xlu0 %786
    %v788 = vsel %vm166, %v758, 0.0
    %789 = vadd.xlane.f32.xlu0 %v788
    %v790 = vpop.xlane.xlu0 %789
    %v791 = vsel %vm166, %v759, 0.0
    %792 = vadd.xlane.f32.xlu0 %v791
    %v793 = vpop.xlane.xlu0 %792
    %v794 = vsel %vm166, %v760, 0.0
    %795 = vadd.xlane.f32.xlu0 %v794
    %v796 = vpop.xlane.xlu0 %795
    %v797 = vsel %vm166, %v761, 0.0
    %798 = vadd.xlane.f32.xlu0 %v797
    %v799 = vpop.xlane.xlu0 %798
    %v800 = vsel %vm166, %v762, 0.0
    %801 = vadd.xlane.f32.xlu0 %v800
    %v802 = vpop.xlane.xlu0 %801
    %v803 = vsel %vm166, %v763, 0.0
    %804 = vadd.xlane.f32.xlu0 %v803
    %v805 = vpop.xlane.xlu0 %804
    %v806 = vsel %vm166, %v764, 0.0
    %807 = vadd.xlane.f32.xlu0 %v806
    %v808 = vpop.xlane.xlu0 %807
    %v809 = vsel %vm166, %v765, 0.0
    %810 = vadd.xlane.f32.xlu0 %v809
    %v811 = vpop.xlane.xlu0 %810
    %v812 = vsel %vm166, %v766, 0.0
    %813 = vadd.xlane.f32.xlu0 %v812
    %v814 = vpop.xlane.xlu0 %813
    %s815 = scalar_lea.vmem [#allocation8], 48
    %v816 = vld [vmem:[%s815] sm:$0xff]
    %v817 = vld [vmem:[%s815 + $0x8] sm:$0xff]
    %v834 = vperm.slane %v769, %v234
    %v835 = vperm.slane %v772, %v234
    %v836 = vperm.slane %v775, %v234
    %v837 = vperm.slane %v778, %v234
    %v838 = vperm.slane %v781, %v234
    %v839 = vperm.slane %v784, %v234
    %v840 = vperm.slane %v787, %v234
    %v841 = vperm.slane %v790, %v234
    %v842 = vperm.slane %v793, %v234
    %v843 = vperm.slane %v796, %v234
    %v844 = vperm.slane %v799, %v234
    %v845 = vperm.slane %v802, %v234
    %v846 = vperm.slane %v805, %v234
    %v847 = vperm.slane %v808, %v234
    %v848 = vperm.slane %v811, %v234
    %v849 = vperm.slane %v814, %v234
    %v850 = vsel %vm251, %v835, %v834
    %v851 = vsel %vm253, %v836, %v850
    %v852 = vsel %vm255, %v837, %v851
    %v853 = vsel %vm257, %v838, %v852
    %v854 = vsel %vm259, %v839, %v853
    %v855 = vsel %vm261, %v840, %v854
    %v856 = vsel %vm263, %v841, %v855
    %v857 = vsel %vm251, %v843, %v842
    %v858 = vsel %vm253, %v844, %v857
    %v859 = vsel %vm255, %v845, %v858
    %v860 = vsel %vm257, %v846, %v859
    %v861 = vsel %vm259, %v847, %v860
    %v862 = vsel %vm261, %v848, %v861
    %v863 = vsel %vm263, %v849, %v862
    %v864 = vsel %vm272, %v856, 0
    %v866 = vsel %vm272, %v863, 0
    %868 = vmatpush.msra.mxu0 0.0
    %869 = vmatpush.msra.mxu0 0.0
    %870 = vmatpush.msra.mxu0 0.0
    %871 = vmatpush.msra.mxu0 0.0
    %872 = vmatpush.msra.mxu0 0.0
    %873 = vmatpush.msra.mxu0 0.0
    %874 = vmatpush.msra.mxu0 0.0
    %875 = vmatpush.msra.mxu0 0.0
    %876 = vmatpush.msra.mxu0 0.0
    %877 = vmatpush.msra.mxu0 0.0
    %878 = vmatpush.msra.mxu0 0.0
    %879 = vmatpush.msra.mxu0 0.0
    %880 = vmatpush.msra.mxu0 0.0
    %881 = vmatpush.msra.mxu0 0.0
    %882 = vmatpush.msra.mxu0 0.0
    %883 = vmatpush.msra.mxu0 %v816
    %884 = vmatmul.f32.gmra.mxu0 %v864
    %v885 = vpop.f32.mrf.mxu0
    %v886 = vadd.f32 0.0, %v885
    %887 = vmatmul.f32.gmra.mxu0 %v866
    %v888 = vpop.f32.mrf.mxu0
    %v889 = vadd.f32 0.0, %v888
    %890 = vdwg.mxu0
    %891 = vmatpush.msra.mxu0 0.0
    %892 = vmatpush.msra.mxu0 0.0
    %893 = vmatpush.msra.mxu0 0.0
    %894 = vmatpush.msra.mxu0 0.0
    %895 = vmatpush.msra.mxu0 0.0
    %896 = vmatpush.msra.mxu0 0.0
    %897 = vmatpush.msra.mxu0 0.0
    %898 = vmatpush.msra.mxu0 0.0
    %899 = vmatpush.msra.mxu0 0.0
    %900 = vmatpush.msra.mxu0 0.0
    %901 = vmatpush.msra.mxu0 0.0
    %902 = vmatpush.msra.mxu0 0.0
    %903 = vmatpush.msra.mxu0 0.0
    %904 = vmatpush.msra.mxu0 0.0
    %905 = vmatpush.msra.mxu0 0.0
    %906 = vmatpush.msra.mxu0 %v817
    %907 = vmatmul.f32.gmra.mxu0 %v864
    %v908 = vpop.f32.mrf.mxu0
    %v909 = vadd.f32 0.0, %v908
    %910 = vmatmul.f32.gmra.mxu0 %v866
    %v911 = vpop.f32.mrf.mxu0
    %v912 = vadd.f32 0.0, %v911
    %913 = vdwg.mxu0
    %v914 = vadd.f32 %v731, %v886
    %v915 = vadd.f32 %v732, %v909
    %v916 = vadd.f32 %v733, %v889
    %v917 = vadd.f32 %v734, %v912
    %v918 = vperm.slane %v118, 4
    %v919 = vperm.slane %v119, 4
    %v920 = vperm.slane %v120, 4
    %v921 = vperm.slane %v121, 4
    %v922 = vperm.slane %v122, 4
    %v923 = vperm.slane %v123, 4
    %v924 = vperm.slane %v124, 4
    %v925 = vperm.slane %v125, 4
    %v926 = vperm.slane %v126, 4
    %v927 = vperm.slane %v127, 4
    %v928 = vperm.slane %v128, 4
    %v929 = vperm.slane %v129, 4
    %v930 = vperm.slane %v130, 4
    %v931 = vperm.slane %v131, 4
    %v932 = vperm.slane %v132, 4
    %v933 = vperm.slane %v133, 4
    %v934 = vmul.f32 %v918, %v118
    %v935 = vmul.f32 %v919, %v119
    %v936 = vmul.f32 %v920, %v120
    %v937 = vmul.f32 %v921, %v121
    %v938 = vmul.f32 %v922, %v122
    %v939 = vmul.f32 %v923, %v123
    %v940 = vmul.f32 %v924, %v124
    %v941 = vmul.f32 %v925, %v125
    %v942 = vmul.f32 %v926, %v126
    %v943 = vmul.f32 %v927, %v127
    %v944 = vmul.f32 %v928, %v128
    %v945 = vmul.f32 %v929, %v129
    %v946 = vmul.f32 %v930, %v130
    %v947 = vmul.f32 %v931, %v131
    %v948 = vmul.f32 %v932, %v132
    %v949 = vmul.f32 %v933, %v133
    %v950 = vsel %vm166, %v934, 0.0
    %951 = vadd.xlane.f32.xlu0 %v950
    %v952 = vpop.xlane.xlu0 %951
    %v953 = vsel %vm166, %v935, 0.0
    %954 = vadd.xlane.f32.xlu0 %v953
    %v955 = vpop.xlane.xlu0 %954
    %v956 = vsel %vm166, %v936, 0.0
    %957 = vadd.xlane.f32.xlu0 %v956
    %v958 = vpop.xlane.xlu0 %957
    %v959 = vsel %vm166, %v937, 0.0
    %960 = vadd.xlane.f32.xlu0 %v959
    %v961 = vpop.xlane.xlu0 %960
    %v962 = vsel %vm166, %v938, 0.0
    %963 = vadd.xlane.f32.xlu0 %v962
    %v964 = vpop.xlane.xlu0 %963
    %v965 = vsel %vm166, %v939, 0.0
    %966 = vadd.xlane.f32.xlu0 %v965
    %v967 = vpop.xlane.xlu0 %966
    %v968 = vsel %vm166, %v940, 0.0
    %969 = vadd.xlane.f32.xlu0 %v968
    %v970 = vpop.xlane.xlu0 %969
    %v971 = vsel %vm166, %v941, 0.0
    %972 = vadd.xlane.f32.xlu0 %v971
    %v973 = vpop.xlane.xlu0 %972
    %v974 = vsel %vm166, %v942, 0.0
    %975 = vadd.xlane.f32.xlu0 %v974
    %v976 = vpop.xlane.xlu0 %975
    %v977 = vsel %vm166, %v943, 0.0
    %978 = vadd.xlane.f32.xlu0 %v977
    %v979 = vpop.xlane.xlu0 %978
    %v980 = vsel %vm166, %v944, 0.0
    %981 = vadd.xlane.f32.xlu0 %v980
    %v982 = vpop.xlane.xlu0 %981
    %v983 = vsel %vm166, %v945, 0.0
    %984 = vadd.xlane.f32.xlu0 %v983
    %v985 = vpop.xlane.xlu0 %984
    %v986 = vsel %vm166, %v946, 0.0
    %987 = vadd.xlane.f32.xlu0 %v986
    %v988 = vpop.xlane.xlu0 %987
    %v989 = vsel %vm166, %v947, 0.0
    %990 = vadd.xlane.f32.xlu0 %v989
    %v991 = vpop.xlane.xlu0 %990
    %v992 = vsel %vm166, %v948, 0.0
    %993 = vadd.xlane.f32.xlu0 %v992
    %v994 = vpop.xlane.xlu0 %993
    %v995 = vsel %vm166, %v949, 0.0
    %996 = vadd.xlane.f32.xlu0 %v995
    %v997 = vpop.xlane.xlu0 %996
    %s998 = scalar_lea.vmem [#allocation8], 64
    %v999 = vld [vmem:[%s998] sm:$0xff]
    %v1000 = vld [vmem:[%s998 + $0x8] sm:$0xff]
    %v1017 = vperm.slane %v952, %v234
    %v1018 = vperm.slane %v955, %v234
    %v1019 = vperm.slane %v958, %v234
    %v1020 = vperm.slane %v961, %v234
    %v1021 = vperm.slane %v964, %v234
    %v1022 = vperm.slane %v967, %v234
    %v1023 = vperm.slane %v970, %v234
    %v1024 = vperm.slane %v973, %v234
    %v1025 = vperm.slane %v976, %v234
    %v1026 = vperm.slane %v979, %v234
    %v1027 = vperm.slane %v982, %v234
    %v1028 = vperm.slane %v985, %v234
    %v1029 = vperm.slane %v988, %v234
    %v1030 = vperm.slane %v991, %v234
    %v1031 = vperm.slane %v994, %v234
    %v1032 = vperm.slane %v997, %v234
    %v1033 = vsel %vm251, %v1018, %v1017
    %v1034 = vsel %vm253, %v1019, %v1033
    %v1035 = vsel %vm255, %v1020, %v1034
    %v1036 = vsel %vm257, %v1021, %v1035
    %v1037 = vsel %vm259, %v1022, %v1036
    %v1038 = vsel %vm261, %v1023, %v1037
    %v1039 = vsel %vm263, %v1024, %v1038
    %v1040 = vsel %vm251, %v1026, %v1025
    %v1041 = vsel %vm253, %v1027, %v1040
    %v1042 = vsel %vm255, %v1028, %v1041
    %v1043 = vsel %vm257, %v1029, %v1042
    %v1044 = vsel %vm259, %v1030, %v1043
    %v1045 = vsel %vm261, %v1031, %v1044
    %v1046 = vsel %vm263, %v1032, %v1045
    %v1047 = vsel %vm272, %v1039, 0
    %v1049 = vsel %vm272, %v1046, 0
    %1051 = vmatpush.msra.mxu0 0.0
    %1052 = vmatpush.msra.mxu0 0.0
    %1053 = vmatpush.msra.mxu0 0.0
    %1054 = vmatpush.msra.mxu0 0.0
    %1055 = vmatpush.msra.mxu0 0.0
    %1056 = vmatpush.msra.mxu0 0.0
    %1057 = vmatpush.msra.mxu0 0.0
    %1058 = vmatpush.msra.mxu0 0.0
    %1059 = vmatpush.msra.mxu0 0.0
    %1060 = vmatpush.msra.mxu0 0.0
    %1061 = vmatpush.msra.mxu0 0.0
    %1062 = vmatpush.msra.mxu0 0.0
    %1063 = vmatpush.msra.mxu0 0.0
    %1064 = vmatpush.msra.mxu0 0.0
    %1065 = vmatpush.msra.mxu0 0.0
    %1066 = vmatpush.msra.mxu0 %v999
    %1067 = vmatmul.f32.gmra.mxu0 %v1047
    %v1068 = vpop.f32.mrf.mxu0
    %v1069 = vadd.f32 0.0, %v1068
    %1070 = vmatmul.f32.gmra.mxu0 %v1049
    %v1071 = vpop.f32.mrf.mxu0
    %v1072 = vadd.f32 0.0, %v1071
    %1073 = vdwg.mxu0
    %1074 = vmatpush.msra.mxu0 0.0
    %1075 = vmatpush.msra.mxu0 0.0
    %1076 = vmatpush.msra.mxu0 0.0
    %1077 = vmatpush.msra.mxu0 0.0
    %1078 = vmatpush.msra.mxu0 0.0
    %1079 = vmatpush.msra.mxu0 0.0
    %1080 = vmatpush.msra.mxu0 0.0
    %1081 = vmatpush.msra.mxu0 0.0
    %1082 = vmatpush.msra.mxu0 0.0
    %1083 = vmatpush.msra.mxu0 0.0
    %1084 = vmatpush.msra.mxu0 0.0
    %1085 = vmatpush.msra.mxu0 0.0
    %1086 = vmatpush.msra.mxu0 0.0
    %1087 = vmatpush.msra.mxu0 0.0
    %1088 = vmatpush.msra.mxu0 0.0
    %1089 = vmatpush.msra.mxu0 %v1000
    %1090 = vmatmul.f32.gmra.mxu0 %v1047
    %v1091 = vpop.f32.mrf.mxu0
    %v1092 = vadd.f32 0.0, %v1091
    %1093 = vmatmul.f32.gmra.mxu0 %v1049
    %v1094 = vpop.f32.mrf.mxu0
    %v1095 = vadd.f32 0.0, %v1094
    %1096 = vdwg.mxu0
    %v1097 = vadd.f32 %v914, %v1069
    %v1098 = vadd.f32 %v915, %v1092
    %v1099 = vadd.f32 %v916, %v1072
    %v1100 = vadd.f32 %v917, %v1095
    %v1101 = vperm.slane %v118, 5
    %v1102 = vperm.slane %v119, 5
    %v1103 = vperm.slane %v120, 5
    %v1104 = vperm.slane %v121, 5
    %v1105 = vperm.slane %v122, 5
    %v1106 = vperm.slane %v123, 5
    %v1107 = vperm.slane %v124, 5
    %v1108 = vperm.slane %v125, 5
    %v1109 = vperm.slane %v126, 5
    %v1110 = vperm.slane %v127, 5
    %v1111 = vperm.slane %v128, 5
    %v1112 = vperm.slane %v129, 5
    %v1113 = vperm.slane %v130, 5
    %v1114 = vperm.slane %v131, 5
    %v1115 = vperm.slane %v132, 5
    %v1116 = vperm.slane %v133, 5
    %v1117 = vmul.f32 %v1101, %v118
    %v1118 = vmul.f32 %v1102, %v119
    %v1119 = vmul.f32 %v1103, %v120
    %v1120 = vmul.f32 %v1104, %v121
    %v1121 = vmul.f32 %v1105, %v122
    %v1122 = vmul.f32 %v1106, %v123
    %v1123 = vmul.f32 %v1107, %v124
    %v1124 = vmul.f32 %v1108, %v125
    %v1125 = vmul.f32 %v1109, %v126
    %v1126 = vmul.f32 %v1110, %v127
    %v1127 = vmul.f32 %v1111, %v128
    %v1128 = vmul.f32 %v1112, %v129
    %v1129 = vmul.f32 %v1113, %v130
    %v1130 = vmul.f32 %v1114, %v131
    %v1131 = vmul.f32 %v1115, %v132
    %v1132 = vmul.f32 %v1116, %v133
    %v1133 = vsel %vm166, %v1117, 0.0
    %1134 = vadd.xlane.f32.xlu0 %v1133
    %v1135 = vpop.xlane.xlu0 %1134
    %v1136 = vsel %vm166, %v1118, 0.0
    %1137 = vadd.xlane.f32.xlu0 %v1136
    %v1138 = vpop.xlane.xlu0 %1137
    %v1139 = vsel %vm166, %v1119, 0.0
    %1140 = vadd.xlane.f32.xlu0 %v1139
    %v1141 = vpop.xlane.xlu0 %1140
    %v1142 = vsel %vm166, %v1120, 0.0
    %1143 = vadd.xlane.f32.xlu0 %v1142
    %v1144 = vpop.xlane.xlu0 %1143
    %v1145 = vsel %vm166, %v1121, 0.0
    %1146 = vadd.xlane.f32.xlu0 %v1145
    %v1147 = vpop.xlane.xlu0 %1146
    %v1148 = vsel %vm166, %v1122, 0.0
    %1149 = vadd.xlane.f32.xlu0 %v1148
    %v1150 = vpop.xlane.xlu0 %1149
    %v1151 = vsel %vm166, %v1123, 0.0
    %1152 = vadd.xlane.f32.xlu0 %v1151
    %v1153 = vpop.xlane.xlu0 %1152
    %v1154 = vsel %vm166, %v1124, 0.0
    %1155 = vadd.xlane.f32.xlu0 %v1154
    %v1156 = vpop.xlane.xlu0 %1155
    %v1157 = vsel %vm166, %v1125, 0.0
    %1158 = vadd.xlane.f32.xlu0 %v1157
    %v1159 = vpop.xlane.xlu0 %1158
    %v1160 = vsel %vm166, %v1126, 0.0
    %1161 = vadd.xlane.f32.xlu0 %v1160
    %v1162 = vpop.xlane.xlu0 %1161
    %v1163 = vsel %vm166, %v1127, 0.0
    %1164 = vadd.xlane.f32.xlu0 %v1163
    %v1165 = vpop.xlane.xlu0 %1164
    %v1166 = vsel %vm166, %v1128, 0.0
    %1167 = vadd.xlane.f32.xlu0 %v1166
    %v1168 = vpop.xlane.xlu0 %1167
    %v1169 = vsel %vm166, %v1129, 0.0
    %1170 = vadd.xlane.f32.xlu0 %v1169
    %v1171 = vpop.xlane.xlu0 %1170
    %v1172 = vsel %vm166, %v1130, 0.0
    %1173 = vadd.xlane.f32.xlu0 %v1172
    %v1174 = vpop.xlane.xlu0 %1173
    %v1175 = vsel %vm166, %v1131, 0.0
    %1176 = vadd.xlane.f32.xlu0 %v1175
    %v1177 = vpop.xlane.xlu0 %1176
    %v1178 = vsel %vm166, %v1132, 0.0
    %1179 = vadd.xlane.f32.xlu0 %v1178
    %v1180 = vpop.xlane.xlu0 %1179
    %s1181 = scalar_lea.vmem [#allocation8], 80
    %v1182 = vld [vmem:[%s1181] sm:$0xff]
    %v1183 = vld [vmem:[%s1181 + $0x8] sm:$0xff]
    %v1200 = vperm.slane %v1135, %v234
    %v1201 = vperm.slane %v1138, %v234
    %v1202 = vperm.slane %v1141, %v234
    %v1203 = vperm.slane %v1144, %v234
    %v1204 = vperm.slane %v1147, %v234
    %v1205 = vperm.slane %v1150, %v234
    %v1206 = vperm.slane %v1153, %v234
    %v1207 = vperm.slane %v1156, %v234
    %v1208 = vperm.slane %v1159, %v234
    %v1209 = vperm.slane %v1162, %v234
    %v1210 = vperm.slane %v1165, %v234
    %v1211 = vperm.slane %v1168, %v234
    %v1212 = vperm.slane %v1171, %v234
    %v1213 = vperm.slane %v1174, %v234
    %v1214 = vperm.slane %v1177, %v234
    %v1215 = vperm.slane %v1180, %v234
    %v1216 = vsel %vm251, %v1201, %v1200
    %v1217 = vsel %vm253, %v1202, %v1216
    %v1218 = vsel %vm255, %v1203, %v1217
    %v1219 = vsel %vm257, %v1204, %v1218
    %v1220 = vsel %vm259, %v1205, %v1219
    %v1221 = vsel %vm261, %v1206, %v1220
    %v1222 = vsel %vm263, %v1207, %v1221
    %v1223 = vsel %vm251, %v1209, %v1208
    %v1224 = vsel %vm253, %v1210, %v1223
    %v1225 = vsel %vm255, %v1211, %v1224
    %v1226 = vsel %vm257, %v1212, %v1225
    %v1227 = vsel %vm259, %v1213, %v1226
    %v1228 = vsel %vm261, %v1214, %v1227
    %v1229 = vsel %vm263, %v1215, %v1228
    %v1230 = vsel %vm272, %v1222, 0
    %v1232 = vsel %vm272, %v1229, 0
    %1234 = vmatpush.msra.mxu0 0.0
    %1235 = vmatpush.msra.mxu0 0.0
    %1236 = vmatpush.msra.mxu0 0.0
    %1237 = vmatpush.msra.mxu0 0.0
    %1238 = vmatpush.msra.mxu0 0.0
    %1239 = vmatpush.msra.mxu0 0.0
    %1240 = vmatpush.msra.mxu0 0.0
    %1241 = vmatpush.msra.mxu0 0.0
    %1242 = vmatpush.msra.mxu0 0.0
    %1243 = vmatpush.msra.mxu0 0.0
    %1244 = vmatpush.msra.mxu0 0.0
    %1245 = vmatpush.msra.mxu0 0.0
    %1246 = vmatpush.msra.mxu0 0.0
    %1247 = vmatpush.msra.mxu0 0.0
    %1248 = vmatpush.msra.mxu0 0.0
    %1249 = vmatpush.msra.mxu0 %v1182
    %1250 = vmatmul.f32.gmra.mxu0 %v1230
    %v1251 = vpop.f32.mrf.mxu0
    %v1252 = vadd.f32 0.0, %v1251
    %1253 = vmatmul.f32.gmra.mxu0 %v1232
    %v1254 = vpop.f32.mrf.mxu0
    %v1255 = vadd.f32 0.0, %v1254
    %1256 = vdwg.mxu0
    %1257 = vmatpush.msra.mxu0 0.0
    %1258 = vmatpush.msra.mxu0 0.0
    %1259 = vmatpush.msra.mxu0 0.0
    %1260 = vmatpush.msra.mxu0 0.0
    %1261 = vmatpush.msra.mxu0 0.0
    %1262 = vmatpush.msra.mxu0 0.0
    %1263 = vmatpush.msra.mxu0 0.0
    %1264 = vmatpush.msra.mxu0 0.0
    %1265 = vmatpush.msra.mxu0 0.0
    %1266 = vmatpush.msra.mxu0 0.0
    %1267 = vmatpush.msra.mxu0 0.0
    %1268 = vmatpush.msra.mxu0 0.0
    %1269 = vmatpush.msra.mxu0 0.0
    %1270 = vmatpush.msra.mxu0 0.0
    %1271 = vmatpush.msra.mxu0 0.0
    %1272 = vmatpush.msra.mxu0 %v1183
    %1273 = vmatmul.f32.gmra.mxu0 %v1230
    %v1274 = vpop.f32.mrf.mxu0
    %v1275 = vadd.f32 0.0, %v1274
    %1276 = vmatmul.f32.gmra.mxu0 %v1232
    %v1277 = vpop.f32.mrf.mxu0
    %v1278 = vadd.f32 0.0, %v1277
    %1279 = vdwg.mxu0
    %v1280 = vadd.f32 %v1097, %v1252
    %v1281 = vadd.f32 %v1098, %v1275
    %v1282 = vadd.f32 %v1099, %v1255
    %v1283 = vadd.f32 %v1100, %v1278
    %v1284 = vperm.slane %v118, 6
    %v1285 = vperm.slane %v119, 6
    %v1286 = vperm.slane %v120, 6
    %v1287 = vperm.slane %v121, 6
    %v1288 = vperm.slane %v122, 6
    %v1289 = vperm.slane %v123, 6
    %v1290 = vperm.slane %v124, 6
    %v1291 = vperm.slane %v125, 6
    %v1292 = vperm.slane %v126, 6
    %v1293 = vperm.slane %v127, 6
    %v1294 = vperm.slane %v128, 6
    %v1295 = vperm.slane %v129, 6
    %v1296 = vperm.slane %v130, 6
    %v1297 = vperm.slane %v131, 6
    %v1298 = vperm.slane %v132, 6
    %v1299 = vperm.slane %v133, 6
    %v1300 = vmul.f32 %v1284, %v118
    %v1301 = vmul.f32 %v1285, %v119
    %v1302 = vmul.f32 %v1286, %v120
    %v1303 = vmul.f32 %v1287, %v121
    %v1304 = vmul.f32 %v1288, %v122
    %v1305 = vmul.f32 %v1289, %v123
    %v1306 = vmul.f32 %v1290, %v124
    %v1307 = vmul.f32 %v1291, %v125
    %v1308 = vmul.f32 %v1292, %v126
    %v1309 = vmul.f32 %v1293, %v127
    %v1310 = vmul.f32 %v1294, %v128
    %v1311 = vmul.f32 %v1295, %v129
    %v1312 = vmul.f32 %v1296, %v130
    %v1313 = vmul.f32 %v1297, %v131
    %v1314 = vmul.f32 %v1298, %v132
    %v1315 = vmul.f32 %v1299, %v133
    %v1316 = vsel %vm166, %v1300, 0.0
    %1317 = vadd.xlane.f32.xlu0 %v1316
    %v1318 = vpop.xlane.xlu0 %1317
    %v1319 = vsel %vm166, %v1301, 0.0
    %1320 = vadd.xlane.f32.xlu0 %v1319
    %v1321 = vpop.xlane.xlu0 %1320
    %v1322 = vsel %vm166, %v1302, 0.0
    %1323 = vadd.xlane.f32.xlu0 %v1322
    %v1324 = vpop.xlane.xlu0 %1323
    %v1325 = vsel %vm166, %v1303, 0.0
    %1326 = vadd.xlane.f32.xlu0 %v1325
    %v1327 = vpop.xlane.xlu0 %1326
    %v1328 = vsel %vm166, %v1304, 0.0
    %1329 = vadd.xlane.f32.xlu0 %v1328
    %v1330 = vpop.xlane.xlu0 %1329
    %v1331 = vsel %vm166, %v1305, 0.0
    %1332 = vadd.xlane.f32.xlu0 %v1331
    %v1333 = vpop.xlane.xlu0 %1332
    %v1334 = vsel %vm166, %v1306, 0.0
    %1335 = vadd.xlane.f32.xlu0 %v1334
    %v1336 = vpop.xlane.xlu0 %1335
    %v1337 = vsel %vm166, %v1307, 0.0
    %1338 = vadd.xlane.f32.xlu0 %v1337
    %v1339 = vpop.xlane.xlu0 %1338
    %v1340 = vsel %vm166, %v1308, 0.0
    %1341 = vadd.xlane.f32.xlu0 %v1340
    %v1342 = vpop.xlane.xlu0 %1341
    %v1343 = vsel %vm166, %v1309, 0.0
    %1344 = vadd.xlane.f32.xlu0 %v1343
    %v1345 = vpop.xlane.xlu0 %1344
    %v1346 = vsel %vm166, %v1310, 0.0
    %1347 = vadd.xlane.f32.xlu0 %v1346
    %v1348 = vpop.xlane.xlu0 %1347
    %v1349 = vsel %vm166, %v1311, 0.0
    %1350 = vadd.xlane.f32.xlu0 %v1349
    %v1351 = vpop.xlane.xlu0 %1350
    %v1352 = vsel %vm166, %v1312, 0.0
    %1353 = vadd.xlane.f32.xlu0 %v1352
    %v1354 = vpop.xlane.xlu0 %1353
    %v1355 = vsel %vm166, %v1313, 0.0
    %1356 = vadd.xlane.f32.xlu0 %v1355
    %v1357 = vpop.xlane.xlu0 %1356
    %v1358 = vsel %vm166, %v1314, 0.0
    %1359 = vadd.xlane.f32.xlu0 %v1358
    %v1360 = vpop.xlane.xlu0 %1359
    %v1361 = vsel %vm166, %v1315, 0.0
    %1362 = vadd.xlane.f32.xlu0 %v1361
    %v1363 = vpop.xlane.xlu0 %1362
    %s1364 = scalar_lea.vmem [#allocation8], 96
    %v1365 = vld [vmem:[%s1364] sm:$0xff]
    %v1366 = vld [vmem:[%s1364 + $0x8] sm:$0xff]
    %v1383 = vperm.slane %v1318, %v234
    %v1384 = vperm.slane %v1321, %v234
    %v1385 = vperm.slane %v1324, %v234
    %v1386 = vperm.slane %v1327, %v234
    %v1387 = vperm.slane %v1330, %v234
    %v1388 = vperm.slane %v1333, %v234
    %v1389 = vperm.slane %v1336, %v234
    %v1390 = vperm.slane %v1339, %v234
    %v1391 = vperm.slane %v1342, %v234
    %v1392 = vperm.slane %v1345, %v234
    %v1393 = vperm.slane %v1348, %v234
    %v1394 = vperm.slane %v1351, %v234
    %v1395 = vperm.slane %v1354, %v234
    %v1396 = vperm.slane %v1357, %v234
    %v1397 = vperm.slane %v1360, %v234
    %v1398 = vperm.slane %v1363, %v234
    %v1399 = vsel %vm251, %v1384, %v1383
    %v1400 = vsel %vm253, %v1385, %v1399
    %v1401 = vsel %vm255, %v1386, %v1400
    %v1402 = vsel %vm257, %v1387, %v1401
    %v1403 = vsel %vm259, %v1388, %v1402
    %v1404 = vsel %vm261, %v1389, %v1403
    %v1405 = vsel %vm263, %v1390, %v1404
    %v1406 = vsel %vm251, %v1392, %v1391
    %v1407 = vsel %vm253, %v1393, %v1406
    %v1408 = vsel %vm255, %v1394, %v1407
    %v1409 = vsel %vm257, %v1395, %v1408
    %v1410 = vsel %vm259, %v1396, %v1409
    %v1411 = vsel %vm261, %v1397, %v1410
    %v1412 = vsel %vm263, %v1398, %v1411
    %v1413 = vsel %vm272, %v1405, 0
    %v1415 = vsel %vm272, %v1412, 0
    %1417 = vmatpush.msra.mxu0 0.0
    %1418 = vmatpush.msra.mxu0 0.0
    %1419 = vmatpush.msra.mxu0 0.0
    %1420 = vmatpush.msra.mxu0 0.0
    %1421 = vmatpush.msra.mxu0 0.0
    %1422 = vmatpush.msra.mxu0 0.0
    %1423 = vmatpush.msra.mxu0 0.0
    %1424 = vmatpush.msra.mxu0 0.0
    %1425 = vmatpush.msra.mxu0 0.0
    %1426 = vmatpush.msra.mxu0 0.0
    %1427 = vmatpush.msra.mxu0 0.0
    %1428 = vmatpush.msra.mxu0 0.0
    %1429 = vmatpush.msra.mxu0 0.0
    %1430 = vmatpush.msra.mxu0 0.0
    %1431 = vmatpush.msra.mxu0 0.0
    %1432 = vmatpush.msra.mxu0 %v1365
    %1433 = vmatmul.f32.gmra.mxu0 %v1413
    %v1434 = vpop.f32.mrf.mxu0
    %v1435 = vadd.f32 0.0, %v1434
    %1436 = vmatmul.f32.gmra.mxu0 %v1415
    %v1437 = vpop.f32.mrf.mxu0
    %v1438 = vadd.f32 0.0, %v1437
    %1439 = vdwg.mxu0
    %1440 = vmatpush.msra.mxu0 0.0
    %1441 = vmatpush.msra.mxu0 0.0
    %1442 = vmatpush.msra.mxu0 0.0
    %1443 = vmatpush.msra.mxu0 0.0
    %1444 = vmatpush.msra.mxu0 0.0
    %1445 = vmatpush.msra.mxu0 0.0
    %1446 = vmatpush.msra.mxu0 0.0
    %1447 = vmatpush.msra.mxu0 0.0
    %1448 = vmatpush.msra.mxu0 0.0
    %1449 = vmatpush.msra.mxu0 0.0
    %1450 = vmatpush.msra.mxu0 0.0
    %1451 = vmatpush.msra.mxu0 0.0
    %1452 = vmatpush.msra.mxu0 0.0
    %1453 = vmatpush.msra.mxu0 0.0
    %1454 = vmatpush.msra.mxu0 0.0
    %1455 = vmatpush.msra.mxu0 %v1366
    %1456 = vmatmul.f32.gmra.mxu0 %v1413
    %v1457 = vpop.f32.mrf.mxu0
    %v1458 = vadd.f32 0.0, %v1457
    %1459 = vmatmul.f32.gmra.mxu0 %v1415
    %v1460 = vpop.f32.mrf.mxu0
    %v1461 = vadd.f32 0.0, %v1460
    %1462 = vdwg.mxu0
    %v1463 = vadd.f32 %v1280, %v1435
    %v1464 = vadd.f32 %v1281, %v1458
    %v1465 = vadd.f32 %v1282, %v1438
    %v1466 = vadd.f32 %v1283, %v1461
    %v1467 = vperm.slane %v118, 7
    %v1468 = vperm.slane %v119, 7
    %v1469 = vperm.slane %v120, 7
    %v1470 = vperm.slane %v121, 7
    %v1471 = vperm.slane %v122, 7
    %v1472 = vperm.slane %v123, 7
    %v1473 = vperm.slane %v124, 7
    %v1474 = vperm.slane %v125, 7
    %v1475 = vperm.slane %v126, 7
    %v1476 = vperm.slane %v127, 7
    %v1477 = vperm.slane %v128, 7
    %v1478 = vperm.slane %v129, 7
    %v1479 = vperm.slane %v130, 7
    %v1480 = vperm.slane %v131, 7
    %v1481 = vperm.slane %v132, 7
    %v1482 = vperm.slane %v133, 7
    %v1483 = vmul.f32 %v1467, %v118
    %v1484 = vmul.f32 %v1468, %v119
    %v1485 = vmul.f32 %v1469, %v120
    %v1486 = vmul.f32 %v1470, %v121
    %v1487 = vmul.f32 %v1471, %v122
    %v1488 = vmul.f32 %v1472, %v123
    %v1489 = vmul.f32 %v1473, %v124
    %v1490 = vmul.f32 %v1474, %v125
    %v1491 = vmul.f32 %v1475, %v126
    %v1492 = vmul.f32 %v1476, %v127
    %v1493 = vmul.f32 %v1477, %v128
    %v1494 = vmul.f32 %v1478, %v129
    %v1495 = vmul.f32 %v1479, %v130
    %v1496 = vmul.f32 %v1480, %v131
    %v1497 = vmul.f32 %v1481, %v132
    %v1498 = vmul.f32 %v1482, %v133
    %v1499 = vsel %vm166, %v1483, 0.0
    %1500 = vadd.xlane.f32.xlu0 %v1499
    %v1501 = vpop.xlane.xlu0 %1500
    %v1502 = vsel %vm166, %v1484, 0.0
    %1503 = vadd.xlane.f32.xlu0 %v1502
    %v1504 = vpop.xlane.xlu0 %1503
    %v1505 = vsel %vm166, %v1485, 0.0
    %1506 = vadd.xlane.f32.xlu0 %v1505
    %v1507 = vpop.xlane.xlu0 %1506
    %v1508 = vsel %vm166, %v1486, 0.0
    %1509 = vadd.xlane.f32.xlu0 %v1508
    %v1510 = vpop.xlane.xlu0 %1509
    %v1511 = vsel %vm166, %v1487, 0.0
    %1512 = vadd.xlane.f32.xlu0 %v1511
    %v1513 = vpop.xlane.xlu0 %1512
    %v1514 = vsel %vm166, %v1488, 0.0
    %1515 = vadd.xlane.f32.xlu0 %v1514
    %v1516 = vpop.xlane.xlu0 %1515
    %v1517 = vsel %vm166, %v1489, 0.0
    %1518 = vadd.xlane.f32.xlu0 %v1517
    %v1519 = vpop.xlane.xlu0 %1518
    %v1520 = vsel %vm166, %v1490, 0.0
    %1521 = vadd.xlane.f32.xlu0 %v1520
    %v1522 = vpop.xlane.xlu0 %1521
    %v1523 = vsel %vm166, %v1491, 0.0
    %1524 = vadd.xlane.f32.xlu0 %v1523
    %v1525 = vpop.xlane.xlu0 %1524
    %v1526 = vsel %vm166, %v1492, 0.0
    %1527 = vadd.xlane.f32.xlu0 %v1526
    %v1528 = vpop.xlane.xlu0 %1527
    %v1529 = vsel %vm166, %v1493, 0.0
    %1530 = vadd.xlane.f32.xlu0 %v1529
    %v1531 = vpop.xlane.xlu0 %1530
    %v1532 = vsel %vm166, %v1494, 0.0
    %1533 = vadd.xlane.f32.xlu0 %v1532
    %v1534 = vpop.xlane.xlu0 %1533
    %v1535 = vsel %vm166, %v1495, 0.0
    %1536 = vadd.xlane.f32.xlu0 %v1535
    %v1537 = vpop.xlane.xlu0 %1536
    %v1538 = vsel %vm166, %v1496, 0.0
    %1539 = vadd.xlane.f32.xlu0 %v1538
    %v1540 = vpop.xlane.xlu0 %1539
    %v1541 = vsel %vm166, %v1497, 0.0
    %1542 = vadd.xlane.f32.xlu0 %v1541
    %v1543 = vpop.xlane.xlu0 %1542
    %v1544 = vsel %vm166, %v1498, 0.0
    %1545 = vadd.xlane.f32.xlu0 %v1544
    %v1546 = vpop.xlane.xlu0 %1545
    %s1547 = scalar_lea.vmem [#allocation8], 112
    %v1548 = vld [vmem:[%s1547] sm:$0xff]
    %v1549 = vld [vmem:[%s1547 + $0x8] sm:$0xff]
    %v1566 = vperm.slane %v1501, %v234
    %v1567 = vperm.slane %v1504, %v234
    %v1568 = vperm.slane %v1507, %v234
    %v1569 = vperm.slane %v1510, %v234
    %v1570 = vperm.slane %v1513, %v234
    %v1571 = vperm.slane %v1516, %v234
    %v1572 = vperm.slane %v1519, %v234
    %v1573 = vperm.slane %v1522, %v234
    %v1574 = vperm.slane %v1525, %v234
    %v1575 = vperm.slane %v1528, %v234
    %v1576 = vperm.slane %v1531, %v234
    %v1577 = vperm.slane %v1534, %v234
    %v1578 = vperm.slane %v1537, %v234
    %v1579 = vperm.slane %v1540, %v234
    %v1580 = vperm.slane %v1543, %v234
    %v1581 = vperm.slane %v1546, %v234
    %v1582 = vsel %vm251, %v1567, %v1566
    %v1583 = vsel %vm253, %v1568, %v1582
    %v1584 = vsel %vm255, %v1569, %v1583
    %v1585 = vsel %vm257, %v1570, %v1584
    %v1586 = vsel %vm259, %v1571, %v1585
    %v1587 = vsel %vm261, %v1572, %v1586
    %v1588 = vsel %vm263, %v1573, %v1587
    %v1589 = vsel %vm251, %v1575, %v1574
    %v1590 = vsel %vm253, %v1576, %v1589
    %v1591 = vsel %vm255, %v1577, %v1590
    %v1592 = vsel %vm257, %v1578, %v1591
    %v1593 = vsel %vm259, %v1579, %v1592
    %v1594 = vsel %vm261, %v1580, %v1593
    %v1595 = vsel %vm263, %v1581, %v1594
    %v1596 = vsel %vm272, %v1588, 0
    %v1598 = vsel %vm272, %v1595, 0
    %1600 = vmatpush.msra.mxu0 0.0
    %1601 = vmatpush.msra.mxu0 0.0
    %1602 = vmatpush.msra.mxu0 0.0
    %1603 = vmatpush.msra.mxu0 0.0
    %1604 = vmatpush.msra.mxu0 0.0
    %1605 = vmatpush.msra.mxu0 0.0
    %1606 = vmatpush.msra.mxu0 0.0
    %1607 = vmatpush.msra.mxu0 0.0
    %1608 = vmatpush.msra.mxu0 0.0
    %1609 = vmatpush.msra.mxu0 0.0
    %1610 = vmatpush.msra.mxu0 0.0
    %1611 = vmatpush.msra.mxu0 0.0
    %1612 = vmatpush.msra.mxu0 0.0
    %1613 = vmatpush.msra.mxu0 0.0
    %1614 = vmatpush.msra.mxu0 0.0
    %1615 = vmatpush.msra.mxu0 %v1548
    %1616 = vmatmul.f32.gmra.mxu0 %v1596
    %v1617 = vpop.f32.mrf.mxu0
    %v1618 = vadd.f32 0.0, %v1617
    %1619 = vmatmul.f32.gmra.mxu0 %v1598
    %v1620 = vpop.f32.mrf.mxu0
    %v1621 = vadd.f32 0.0, %v1620
    %1622 = vdwg.mxu0
    %1623 = vmatpush.msra.mxu0 0.0
    %1624 = vmatpush.msra.mxu0 0.0
    %1625 = vmatpush.msra.mxu0 0.0
    %1626 = vmatpush.msra.mxu0 0.0
    %1627 = vmatpush.msra.mxu0 0.0
    %1628 = vmatpush.msra.mxu0 0.0
    %1629 = vmatpush.msra.mxu0 0.0
    %1630 = vmatpush.msra.mxu0 0.0
    %1631 = vmatpush.msra.mxu0 0.0
    %1632 = vmatpush.msra.mxu0 0.0
    %1633 = vmatpush.msra.mxu0 0.0
    %1634 = vmatpush.msra.mxu0 0.0
    %1635 = vmatpush.msra.mxu0 0.0
    %1636 = vmatpush.msra.mxu0 0.0
    %1637 = vmatpush.msra.mxu0 0.0
    %1638 = vmatpush.msra.mxu0 %v1549
    %1639 = vmatmul.f32.gmra.mxu0 %v1596
    %v1640 = vpop.f32.mrf.mxu0
    %v1641 = vadd.f32 0.0, %v1640
    %1642 = vmatmul.f32.gmra.mxu0 %v1598
    %v1643 = vpop.f32.mrf.mxu0
    %v1644 = vadd.f32 0.0, %v1643
    %1645 = vdwg.mxu0
    %v1646 = vadd.f32 %v1463, %v1618
    %v1647 = vadd.f32 %v1464, %v1641
    %v1648 = vadd.f32 %v1465, %v1621
    %v1649 = vadd.f32 %v1466, %v1644
    %v1650 = vld [vmem:[%s4] sm:$0x3]
    %v1652 = vperm.slane %v1650, 0
    %v1653 = vperm.slane %v1650, 1
    %v1656 = vadd.f32 %v1646, %v1652
    %v1657 = vadd.f32 %v1647, %v1653
    %v1658 = vadd.f32 %v1648, %v1652
    %v1659 = vadd.f32 %v1649, %v1653
    %1660 = vst [vmem:[#allocation10] sm:$0xff] %v1656
    %1661 = vst [vmem:[#allocation10 + $0x8] sm:$0xff] %v1657
    %1662 = vst [vmem:[#allocation10 + $0x10] sm:$0xff] %v1658
    %1663 = vst [vmem:[#allocation10 + $0x18] sm:$0xff] %v1659
    // Predicated region
    $region38: #{tpu_custom_call.1} parent=1 // pred_check
      _
    $region39: #{tpu_custom_call.1} parent=1 // pred_check_branch
      %1665 = sbr.rel (0) target = $region41
    $region40: #{tpu_custom_call.1} parent=1 // pred_region
      %1667 = vsyncadd [#allocation4], 0
      %s1668 = sshll.u32 [#allocation10], 4
      %s1669 = int_to_ptr.vmem [resolvable:$true] %s1668
      %s1670 = sshll.u32 %s5, 4
      %s1671 = int_to_ptr.hbm [resolvable:$true] %s1670
      %1676 = dma.vmem_to_hbm [thread:$0]  %s1669, 512, %s1671, [#allocation4], 256, 256, 16
    $region41: #{tpu_custom_call.1} parent=1 // pred_fallthru
      _
    // Predicated region
    $region42: #{tpu_custom_call.1} parent=1 // pred_check
      _
    $region43: #{tpu_custom_call.1} parent=1 // pred_check_branch
      %1678 = sbr.rel (0) target = $region45
    $region44: #{tpu_custom_call.1} parent=1 // pred_region
      %1680 = dma.done [#allocation4], 512
    $region45: #{tpu_custom_call.1} parent=1 // pred_fallthru
      _
    %1681 = vsyncpa [#allocation3], 1
    %1682 = vsyncpa [#allocation6], 1
    %1683 = vsyncpa [#allocation9], 1
    %1684 = vsyncpa [#allocation4], 1

</llo_original>
